<compile_context>
chip_gen: v7x
topology: tpu7x:2x2x1
jax: 0.10.0
libtpu: 0.0.40
codegen_flags: <defaults>
</compile_context>

<pallas_src>
import functools

import jax
import jax.numpy as jnp
from jax.experimental import pallas as pl
from jax.experimental.pallas import tpu as pltpu

EPS = 1e-5
LANE = 128            # pad channel dims to a multiple of the lane width
KPAD = 128            # pad the contraction dim to a multiple of 128 (MXU cadence)
SUBLANE = 8
TILE_M_MM = 512       # rows per matmul grid step (fits all generations' VMEM)
TILE_M_EW2 = 2048     # target rows per 2-stream elementwise grid step
TILE_M_EW3 = 1024     # target rows per 3-stream elementwise grid step
MIN_VMEM = 32 * 1024 * 1024
MAX_VMEM = 64 * 1024 * 1024   # v7x physical VMEM per TensorCore


def _round_up(x, m):
    return (x + m - 1) // m * m


def _ew_tile(m_pad, tile_m, target):
    """Largest multiple of tile_m that divides m_pad and is <= target."""
    n = m_pad // tile_m
    best = 1
    for d in range(1, n + 1):
        if n % d == 0 and d * tile_m <= target:
            best = d
    return best * tile_m


def _vmem_params(bytes_estimate, semantics):
    # TODO(synk): use pltpu.CORE_PARALLEL on the M axis for v7x's two
    # TensorCores; kept "parallel" here for portability across generations.
    vmem = min(max(int(1.5 * bytes_estimate) + (4 << 20), MIN_VMEM), MAX_VMEM)
    return pltpu.CompilerParams(dimension_semantics=semantics,
                                vmem_limit_bytes=vmem)


# ----------------------------------------------------------------------------
# Single-buffering probe for grid-invariant (resident) operands.
# ----------------------------------------------------------------------------
_BUFFERED1_OK = None


def _single_buffer_mode():
    """Return pl.Buffered(1) if the installed Pallas supports it, else None."""
    global _BUFFERED1_OK
    if _BUFFERED1_OK is None:
        try:
            def _probe(x_ref, o_ref):
                o_ref[...] = x_ref[...] + 1.0

            out = pl.pallas_call(
                _probe,
                out_shape=jax.ShapeDtypeStruct((16, 128), jnp.float32),
                grid_spec=pltpu.PrefetchScalarGridSpec(
                    num_scalar_prefetch=0,
                    grid=(2,),
                    in_specs=[pl.BlockSpec((8, 128), lambda i: (0, 0),
                                           pipeline_mode=pl.Buffered(1))],
                    out_specs=pl.BlockSpec((8, 128), lambda i: (i, 0))),
            )(jnp.zeros((8, 128), jnp.float32))
            jax.block_until_ready(out)
            _BUFFERED1_OK = True
        except Exception:
            _BUFFERED1_OK = False
    return pl.Buffered(1) if _BUFFERED1_OK else None


def _resident_spec(shape):
    """BlockSpec for a grid-invariant operand: constant index_map, and a single
    VMEM buffer when supported (no pipelining benefit from a second buffer)."""
    ndim = len(shape)
    idx = lambda i: (0,) * ndim
    mode = _single_buffer_mode()
    if mode is not None:
        return pl.BlockSpec(shape, idx, pipeline_mode=mode)
    return pl.BlockSpec(shape, idx)


# ----------------------------------------------------------------------------
# Kernel 1a: tiled matmul (patches @ weights) + per-tile partial BN statistics.
# ----------------------------------------------------------------------------
def _matmul_stats_kernel(p_ref, w_ref, y_ref, s_ref, ss_ref):
    # p_ref: [TM, Kp] bf16, w_ref: [Kp, Cp] bf16 (resident),
    # y_ref: [TM, Cp] bf16, s_ref/ss_ref: [1, 1, Cp] f32.
    acc = jnp.dot(p_ref[...], w_ref[...], preferred_element_type=jnp.float32)
    y_ref[...] = acc.astype(y_ref.dtype)
    s_ref[...] = jnp.sum(acc, axis=0, keepdims=True)[None, :, :]
    ss_ref[...] = jnp.sum(acc * acc, axis=0, keepdims=True)[None, :, :]


# ----------------------------------------------------------------------------
# Kernel 1b: same, with the downsample 1x1 conv (and its stats) fused in.
# ----------------------------------------------------------------------------
def _matmul_ds_stats_kernel(p_ref, w_ref, wd_ref, y_ref, id_ref,
                            s_ref, ss_ref, sd_ref, ssd_ref, *, k_off, k_len):
    p = p_ref[...]
    acc = jnp.dot(p, w_ref[...], preferred_element_type=jnp.float32)
    y_ref[...] = acc.astype(y_ref.dtype)
    s_ref[...] = jnp.sum(acc, axis=0, keepdims=True)[None, :, :]
    ss_ref[...] = jnp.sum(acc * acc, axis=0, keepdims=True)[None, :, :]
    # 1x1 strided downsample conv: its im2col LHS is exactly the centre-tap
    # K-slice of conv1's 3x3 patches.  wd's padded extra rows are zero, so any
    # neighbouring patch columns swept in by the sublane-rounded slice width
    # contribute nothing.
    pc = p[:, k_off:k_off + k_len]
    accd = jnp.dot(pc, wd_ref[...], preferred_element_type=jnp.float32)
    id_ref[...] = accd.astype(id_ref.dtype)
    sd_ref[...] = jnp.sum(accd, axis=0, keepdims=True)[None, :, :]
    ssd_ref[...] = jnp.sum(accd * accd, axis=0, keepdims=True)[None, :, :]


def conv_matmul_stats(patches, w_mat, *, m_pad, tile_m, c_pad,
                      wd_mat=None, cin=None):
    """patches [M, K] bf16 @ w_mat [K, C] -> y [m_pad, c_pad] bf16 plus
    per-tile BN partial (sum, sumsq).  If wd_mat is given, the 1x1-downsample
    conv is fused (LHS = centre-tap slice of the 3x3 patches) and
    (identity, its stats) are returned as well."""
    M, K = patches.shape
    Kw, C = w_mat.shape
    assert Kw == K
    assert patches.dtype == jnp.bfloat16, "cast activations to bf16 before im2col"
    k_pad = _round_up(K, KPAD)
    n_tiles = m_pad // tile_m

    # Zero padding keeps both the matmul result and the batch statistics exact
    # (we divide by the true row count M downstream).
    # TODO(synk): form 3x3 patches in-kernel from a halo'd NHWC tile to remove
    # the HBM-materialized im2col 9x read amplification; kept as XLA glue here
    # for lowering robustness.
    p = jnp.pad(patches, ((0, m_pad - M), (0, k_pad - K)))
    w = jnp.pad(w_mat.astype(jnp.bfloat16), ((0, k_pad - K), (0, c_pad - C)))

    stat_shape = jax.ShapeDtypeStruct((n_tiles, 1, c_pad), jnp.float32)
    stat_spec = pl.BlockSpec((1, 1, c_pad), lambda i: (i, 0, 0))
    y_spec = pl.BlockSpec((tile_m, c_pad), lambda i: (i, 0))
    p_spec = pl.BlockSpec((tile_m, k_pad), lambda i: (i, 0))

    fused = wd_mat is not None
    if fused:
        k_off = 4 * cin                       # centre tap (1,1) of the 3x3 patch
        k_len = _round_up(cin, SUBLANE)
        wd = jnp.pad(wd_mat.astype(jnp.bfloat16),
                     ((0, k_len - cin), (0, c_pad - C)))
        kernel = functools.partial(_matmul_ds_stats_kernel,
                                   k_off=k_off, k_len=k_len)
        out_shape = (jax.ShapeDtypeStruct((m_pad, c_pad), jnp.bfloat16),
                     jax.ShapeDtypeStruct((m_pad, c_pad), jnp.bfloat16),
                     stat_shape, stat_shape, stat_shape, stat_shape)
        in_specs = [p_spec, _resident_spec((k_pad, c_pad)),
                    _resident_spec((k_len, c_pad))]
        out_specs = (y_spec, y_spec, stat_spec, stat_spec, stat_spec, stat_spec)
        operands = (p, w, wd)
        flops = 2 * m_pad * c_pad * (k_pad + k_len)
        bytes_acc = (m_pad * k_pad * 2 + (k_pad + k_len) * c_pad * 2
                     + 2 * m_pad * c_pad * 2 + 4 * n_tiles * c_pad * 4)
        vmem_est = (2 * tile_m * k_pad * 2                 # double-buffered LHS
                    + (k_pad + k_len) * c_pad * 2          # resident weights
                    + 2 * 2 * tile_m * c_pad * 2           # y + identity
                    + 4 * 2 * c_pad * 4)                   # stats
    else:
        kernel = _matmul_stats_kernel
        out_shape = (jax.ShapeDtypeStruct((m_pad, c_pad), jnp.bfloat16),
                     stat_shape, stat_shape)
        in_specs = [p_spec, _resident_spec((k_pad, c_pad))]
        out_specs = (y_spec, stat_spec, stat_spec)
        operands = (p, w)
        flops = 2 * m_pad * k_pad * c_pad
        bytes_acc = (m_pad * k_pad * 2 + k_pad * c_pad * 2
                     + m_pad * c_pad * 2 + 2 * n_tiles * c_pad * 4)
        vmem_est = (2 * tile_m * k_pad * 2 + k_pad * c_pad * 2
                    + 2 * tile_m * c_pad * 2 + 2 * 2 * c_pad * 4)

    outs = pl.pallas_call(
        kernel,
        out_shape=out_shape,
        grid_spec=pltpu.PrefetchScalarGridSpec(
            num_scalar_prefetch=0,
            grid=(n_tiles,),
            in_specs=in_specs,
            out_specs=out_specs,
        ),
        compiler_params=_vmem_params(vmem_est, ("parallel",)),
        cost_estimate=pl.CostEstimate(flops=flops, transcendentals=0,
                                      bytes_accessed=bytes_acc),
    )(*operands)

    if fused:
        y, identity, s, ss, sd, ssd = outs
        return y, identity, (s, ss), (sd, ssd)
    y, s, ss = outs
    return y, (s, ss)


# ----------------------------------------------------------------------------
# Tiny JAX glue: finish the global BN reduction -> per-channel scale/shift.
# ----------------------------------------------------------------------------
def bn_scale_shift(stats, count, gamma_p, beta_p):
    s, ss = stats
    s = jnp.sum(s, axis=(0, 1))
    ss = jnp.sum(ss, axis=(0, 1))
    mean = s / count
    var = jnp.maximum(ss / count - mean * mean, 0.0)   # clamp: no negative var
    inv = jax.lax.rsqrt(var + EPS)
    scale = gamma_p * inv
    shift = beta_p - mean * scale
    return scale[None, :].astype(jnp.float32), shift[None, :].astype(jnp.float32)


# ----------------------------------------------------------------------------
# Kernel 2: tiled BN apply (+ optional ReLU).  Pure HBM-bandwidth pass.
# ----------------------------------------------------------------------------
def _bn_act_kernel(y_ref, s_ref, t_ref, o_ref, *, relu):
    y = y_ref[...].astype(jnp.float32) * s_ref[...] + t_ref[...]
    if relu:
        y = jnp.maximum(y, 0.0)
    o_ref[...] = y.astype(o_ref.dtype)


def bn_act(y, scale, shift, *, relu, out_dtype, tile_m):
    m_pad, c_pad = y.shape
    ew = _ew_tile(m_pad, tile_m, TILE_M_EW2)
    n_tiles = m_pad // ew
    in_bytes = m_pad * c_pad * y.dtype.itemsize
    out_bytes = m_pad * c_pad * jnp.dtype(out_dtype).itemsize
    vmem_est = 2 * ew * c_pad * (y.dtype.itemsize + jnp.dtype(out_dtype).itemsize)
    return pl.pallas_call(
        functools.partial(_bn_act_kernel, relu=relu),
        out_shape=jax.ShapeDtypeStruct((m_pad, c_pad), out_dtype),
        grid_spec=pltpu.PrefetchScalarGridSpec(
            num_scalar_prefetch=0,
            grid=(n_tiles,),
            in_specs=[pl.BlockSpec((ew, c_pad), lambda i: (i, 0)),
                      _resident_spec((1, c_pad)),
                      _resident_spec((1, c_pad))],
            out_specs=pl.BlockSpec((ew, c_pad), lambda i: (i, 0)),
        ),
        compiler_params=_vmem_params(vmem_est, ("parallel",)),
        cost_estimate=pl.CostEstimate(flops=2 * m_pad * c_pad, transcendentals=0,
                                      bytes_accessed=in_bytes + out_bytes),
    )(y, scale, shift)


# ----------------------------------------------------------------------------
# Kernel 3: tiled BN apply + residual (with its own fused BN) + ReLU.
# ----------------------------------------------------------------------------
def _bn_add_relu_kernel(y_ref, id_ref, s_ref, t_ref, sid_ref, tid_ref, o_ref):
    y = y_ref[...].astype(jnp.float32) * s_ref[...] + t_ref[...]
    idn = id_ref[...].astype(jnp.float32) * sid_ref[...] + tid_ref[...]
    o_ref[...] = jnp.maximum(y + idn, 0.0).astype(o_ref.dtype)


def bn_add_relu(y, identity, scale, shift, id_scale, id_shift, *, tile_m):
    m_pad, c_pad = y.shape
    ew = _ew_tile(m_pad, tile_m, TILE_M_EW3)
    n_tiles = m_pad // ew
    in_bytes = m_pad * c_pad * (y.dtype.itemsize + identity.dtype.itemsize)
    out_bytes = m_pad * c_pad * 4
    vmem_est = 2 * ew * c_pad * (y.dtype.itemsize + identity.dtype.itemsize + 4)
    return pl.pallas_call(
        _bn_add_relu_kernel,
        out_shape=jax.ShapeDtypeStruct((m_pad, c_pad), jnp.float32),
        grid_spec=pltpu.PrefetchScalarGridSpec(
            num_scalar_prefetch=0,
            grid=(n_tiles,),
            in_specs=[pl.BlockSpec((ew, c_pad), lambda i: (i, 0)),
                      pl.BlockSpec((ew, c_pad), lambda i: (i, 0)),
                      _resident_spec((1, c_pad)),
                      _resident_spec((1, c_pad)),
                      _resident_spec((1, c_pad)),
                      _resident_spec((1, c_pad))],
            out_specs=pl.BlockSpec((ew, c_pad), lambda i: (i, 0)),
        ),
        compiler_params=_vmem_params(vmem_est, ("parallel",)),
        cost_estimate=pl.CostEstimate(flops=6 * m_pad * c_pad, transcendentals=0,
                                      bytes_accessed=in_bytes + out_bytes),
    )(y, identity, scale, shift, id_scale, id_shift)


# ----------------------------------------------------------------------------
# JAX glue: im2col patch extraction (layout-only work) and weight reshaping.
# ----------------------------------------------------------------------------
def im2col(x_nhwc, k, stride, pad):
    N, H, W, C = x_nhwc.shape
    xp = jnp.pad(x_nhwc, ((0, 0), (pad, pad), (pad, pad), (0, 0)))
    Ho = (H + 2 * pad - k) // stride + 1
    Wo = (W + 2 * pad - k) // stride + 1
    cols = []
    for i in range(k):
        for j in range(k):
            cols.append(xp[:, i:i + stride * Ho:stride, j:j + stride * Wo:stride, :])
    patches = jnp.stack(cols, axis=3)                # [N, Ho, Wo, k*k, C]
    return patches.reshape(N * Ho * Wo, k * k * C), Ho, Wo


def torch_weight_to_matmul(w_oikk):
    # [Cout, Cin, kh, kw] -> [kh*kw*Cin, Cout], matching im2col column order.
    return jnp.transpose(w_oikk, (2, 3, 1, 0)).reshape(-1, w_oikk.shape[0])


def _pad_vec(v, c_pad, fill):
    v = v.reshape(-1).astype(jnp.float32)
    return jnp.pad(v, (0, c_pad - v.shape[0]), constant_values=fill)


# ----------------------------------------------------------------------------
# BasicBlock forward
# ----------------------------------------------------------------------------
def basic_block_forward(x_nchw, params, stride):
    N, Cin, H, W = x_nchw.shape
    Cout = params["w1"].shape[0]
    # NCHW -> NHWC and cast to bf16 BEFORE im2col (halves the patch stream).
    x = jnp.transpose(x_nchw, (0, 2, 3, 1)).astype(jnp.bfloat16)

    Ho = (H + 2 - 3) // stride + 1
    Wo = (W + 2 - 3) // stride + 1
    M = N * Ho * Wo
    tile_m = min(TILE_M_MM, _round_up(M, SUBLANE))
    m_pad = _round_up(M, tile_m)
    c_pad = _round_up(Cout, LANE)

    g1 = _pad_vec(params["g1"], c_pad, 1.0)
    b1 = _pad_vec(params["b1"], c_pad, 0.0)
    g2 = _pad_vec(params["g2"], c_pad, 1.0)
    b2 = _pad_vec(params["b2"], c_pad, 0.0)

    has_downsample = (stride != 1 or Cin != Cout)

    # conv1 (3x3, stride, pad=1) + bn1-stats, with the downsample 1x1 conv
    # (+ its bn-stats) fused into the same matmul kernel when present.
    p1, _, _ = im2col(x, 3, stride, 1)
    w1 = torch_weight_to_matmul(params["w1"])
    if has_downsample:
        wd = torch_weight_to_matmul(params["wd"])
        y1, identity, st1, std = conv_matmul_stats(
            p1, w1, m_pad=m_pad, tile_m=tile_m, c_pad=c_pad,
            wd_mat=wd, cin=Cin)
        gd = _pad_vec(params["gd"], c_pad, 1.0)
        bd = _pad_vec(params["bd"], c_pad, 0.0)
        id_scale, id_shift = bn_scale_shift(std, M, gd, bd)
    else:
        y1, st1 = conv_matmul_stats(p1, w1, m_pad=m_pad, tile_m=tile_m,
                                    c_pad=c_pad)
        # Identity stays bf16 (the residual kernel upcasts on read).
        identity = jnp.pad(x.reshape(M, Cin), ((0, m_pad - M), (0, c_pad - Cin)))
        id_scale = jnp.ones((1, c_pad), jnp.float32)
        id_shift = jnp.zeros((1, c_pad), jnp.float32)

    # bn1 + relu; out1 written in bf16 so conv2's patches are MXU-ready.
    s1, t1 = bn_scale_shift(st1, M, g1, b1)
    out1 = bn_act(y1, s1, t1, relu=True, out_dtype=jnp.bfloat16, tile_m=tile_m)
    out1_nhwc = out1[:M, :Cout].reshape(N, Ho, Wo, Cout)

    # conv2 (3x3, stride=1, pad=1) + bn2 + residual (with fused downsample bn)
    # + relu.
    p2, _, _ = im2col(out1_nhwc, 3, 1, 1)
    y2, st2 = conv_matmul_stats(p2, torch_weight_to_matmul(params["w2"]),
                                m_pad=m_pad, tile_m=tile_m, c_pad=c_pad)
    s2, t2 = bn_scale_shift(st2, M, g2, b2)
    out = bn_add_relu(y2, identity, s2, t2, id_scale, id_shift, tile_m=tile_m)

    out_nhwc = out[:M, :Cout].reshape(N, Ho, Wo, Cout)
    # TODO(synk): stacked blocks should stay NHWC (and possibly bf16) at the
    # block boundary to drop this extra f32 HBM transpose pass; kept NCHW/f32
    # here to match the PyTorch module's interface.
    return jnp.transpose(out_nhwc, (0, 3, 1, 2))     # NHWC -> NCHW


def init_params(key, in_channels, out_channels):
    ks = jax.random.split(key, 7)
    return {
        # conv weights in PyTorch layout [Cout, Cin, kh, kw]
        "w1": 0.1 * jax.random.normal(ks[0], (out_channels, in_channels, 3, 3), jnp.float32),
        "w2": 0.1 * jax.random.normal(ks[1], (out_channels, out_channels, 3, 3), jnp.float32),
        "wd": 0.1 * jax.random.normal(ks[2], (out_channels, in_channels, 1, 1), jnp.float32),
        # BN affine params
        "g1": 1.0 + 0.1 * jax.random.normal(ks[3], (1, out_channels), jnp.float32),
        "b1": 0.1 * jax.random.normal(ks[4], (1, out_channels), jnp.float32),
        "g2": 1.0 + 0.1 * jax.random.normal(ks[5], (1, out_channels), jnp.float32),
        "b2": 0.1 * jax.random.normal(ks[6], (1, out_channels), jnp.float32),
        "gd": jnp.ones((1, out_channels), jnp.float32),
        "bd": jnp.zeros((1, out_channels), jnp.float32),
    }


if __name__ == "__main__":
    key = jax.random.PRNGKey(0)
    kx, kp = jax.random.split(key)

    N, Cin, H, W = 2, 4, 16, 16
    Cout, stride = 8, 2                      # exercises the fused downsample path

    x = jax.random.normal(kx, (N, Cin, H, W), jnp.float32)   # NCHW, like PyTorch
    params = init_params(kp, Cin, Cout)

    fwd = jax.jit(functools.partial(basic_block_forward, stride=stride))
    out = fwd(x, params)
    jax.block_until_ready(out)

    assert out.shape == (N, Cout, H // stride, W // stride)
    assert bool(jnp.all(jnp.isfinite(out)))
    assert bool(jnp.all(out >= 0.0))         # final ReLU
    print("KERNEL_OK")
</pallas_src>

<mosaic_0001>
module attributes {stable_mosaic.version = 11 : i64} {
  func.func @_matmul_ds_stats_kernel(%arg0: i32, %arg1: memref<128x128xbf16, #tpu.memory_space<vmem>>, %arg2: memref<128x128xbf16, #tpu.memory_space<vmem>>, %arg3: memref<8x128xbf16, #tpu.memory_space<vmem>>, %arg4: memref<128x128xbf16, #tpu.memory_space<vmem>>, %arg5: memref<128x128xbf16, #tpu.memory_space<vmem>>, %arg6: memref<1x1x128xf32, #tpu.memory_space<vmem>>, %arg7: memref<1x1x128xf32, #tpu.memory_space<vmem>>, %arg8: memref<1x1x128xf32, #tpu.memory_space<vmem>>, %arg9: memref<1x1x128xf32, #tpu.memory_space<vmem>>) attributes {dimension_semantics = [#tpu.dimension_semantics<parallel>], iteration_bounds = array<i64: 1>, scalar_prefetch = 0 : i64, scratch_operands = 0 : i64, tpu.core_type = #tpu.core_type<tc>, window_params = [{transform_indices = @transform_0, window_bounds = array<i64: 128, 128>}, {pipeline_mode = #tpu.pipeline_mode<synchronous>, transform_indices = @transform_1, window_bounds = array<i64: 128, 128>}, {pipeline_mode = #tpu.pipeline_mode<synchronous>, transform_indices = @transform_2, window_bounds = array<i64: 8, 128>}, {transform_indices = @transform_3, window_bounds = array<i64: 128, 128>}, {transform_indices = @transform_4, window_bounds = array<i64: 128, 128>}, {transform_indices = @transform_5, window_bounds = array<i64: 1, 1, 128>}, {transform_indices = @transform_6, window_bounds = array<i64: 1, 1, 128>}, {transform_indices = @transform_7, window_bounds = array<i64: 1, 1, 128>}, {transform_indices = @transform_8, window_bounds = array<i64: 1, 1, 128>}]} {
    %c0 = arith.constant 0 : index
    %c0_0 = arith.constant 0 : index
    %0 = vector.load %arg1[%c0, %c0_0] : memref<128x128xbf16, #tpu.memory_space<vmem>>, vector<128x128xbf16>
    %c0_1 = arith.constant 0 : index
    %c0_2 = arith.constant 0 : index
    %1 = vector.load %arg2[%c0_1, %c0_2] : memref<128x128xbf16, #tpu.memory_space<vmem>>, vector<128x128xbf16>
    %cst = arith.constant dense<0.000000e+00> : vector<128x128xf32>
    %2 = tpu.matmul %0, %1, %cst {dimension_numbers = #tpu.dot_dimension_numbers<[1], [0], [0], [1], [0, 0, 1, 1], [], []>} : vector<128x128xbf16>, vector<128x128xbf16>, vector<128x128xf32> -> vector<128x128xf32>
    %3 = arith.truncf %2 : vector<128x128xf32> to vector<128x128xbf16>
    %c0_3 = arith.constant 0 : index
    %c0_4 = arith.constant 0 : index
    %4 = vector.load %arg4[%c0_3, %c0_4] : memref<128x128xbf16, #tpu.memory_space<vmem>>, vector<128x128xbf16>
    tpu.vector_store %arg4[%c0_3, %c0_4], %3 {strides = array<i32>} : memref<128x128xbf16, #tpu.memory_space<vmem>>, vector<128x128xbf16>,
    %cst_5 = arith.constant dense<0.000000e+00> : vector<128xf32>
    %5 = vector.multi_reduction <add>, %2, %cst_5 [0] : vector<128x128xf32> to vector<128xf32>
    %6 = vector.shape_cast %5 : vector<128xf32> to vector<1x128xf32>
    %7 = vector.shape_cast %6 : vector<1x128xf32> to vector<1x1x128xf32>
    %c0_6 = arith.constant 0 : index
    %c0_7 = arith.constant 0 : index
    %c0_8 = arith.constant 0 : index
    %8 = vector.load %arg6[%c0_6, %c0_7, %c0_8] : memref<1x1x128xf32, #tpu.memory_space<vmem>>, vector<1x1x128xf32>
    tpu.vector_store %arg6[%c0_6, %c0_7, %c0_8], %7 {strides = array<i32>} : memref<1x1x128xf32, #tpu.memory_space<vmem>>, vector<1x1x128xf32>,
    %9 = arith.mulf %2, %2 : vector<128x128xf32>
    %cst_9 = arith.constant dense<0.000000e+00> : vector<128xf32>
    %10 = vector.multi_reduction <add>, %9, %cst_9 [0] : vector<128x128xf32> to vector<128xf32>
    %11 = vector.shape_cast %10 : vector<128xf32> to vector<1x128xf32>
    %12 = vector.shape_cast %11 : vector<1x128xf32> to vector<1x1x128xf32>
    %c0_10 = arith.constant 0 : index
    %c0_11 = arith.constant 0 : index
    %c0_12 = arith.constant 0 : index
    %13 = vector.load %arg7[%c0_10, %c0_11, %c0_12] : memref<1x1x128xf32, #tpu.memory_space<vmem>>, vector<1x1x128xf32>
    tpu.vector_store %arg7[%c0_10, %c0_11, %c0_12], %12 {strides = array<i32>} : memref<1x1x128xf32, #tpu.memory_space<vmem>>, vector<1x1x128xf32>,
    %14 = vector.extract_strided_slice %0 {offsets = [0, 16], sizes = [128, 8], strides = [1, 1]} : vector<128x128xbf16> to vector<128x8xbf16>
    %c0_13 = arith.constant 0 : index
    %c0_14 = arith.constant 0 : index
    %15 = vector.load %arg3[%c0_13, %c0_14] : memref<8x128xbf16, #tpu.memory_space<vmem>>, vector<8x128xbf16>
    %cst_15 = arith.constant dense<0.000000e+00> : vector<128x128xf32>
    %16 = tpu.matmul %14, %15, %cst_15 {dimension_numbers = #tpu.dot_dimension_numbers<[1], [0], [0], [1], [0, 0, 1, 1], [], []>} : vector<128x8xbf16>, vector<8x128xbf16>, vector<128x128xf32> -> vector<128x128xf32>
    %17 = arith.truncf %16 : vector<128x128xf32> to vector<128x128xbf16>
    %c0_16 = arith.constant 0 : index
    %c0_17 = arith.constant 0 : index
    %18 = vector.load %arg5[%c0_16, %c0_17] : memref<128x128xbf16, #tpu.memory_space<vmem>>, vector<128x128xbf16>
    tpu.vector_store %arg5[%c0_16, %c0_17], %17 {strides = array<i32>} : memref<128x128xbf16, #tpu.memory_space<vmem>>, vector<128x128xbf16>,
    %cst_18 = arith.constant dense<0.000000e+00> : vector<128xf32>
    %19 = vector.multi_reduction <add>, %16, %cst_18 [0] : vector<128x128xf32> to vector<128xf32>
    %20 = vector.shape_cast %19 : vector<128xf32> to vector<1x128xf32>
    %21 = vector.shape_cast %20 : vector<1x128xf32> to vector<1x1x128xf32>
    %c0_19 = arith.constant 0 : index
    %c0_20 = arith.constant 0 : index
    %c0_21 = arith.constant 0 : index
    %22 = vector.load %arg8[%c0_19, %c0_20, %c0_21] : memref<1x1x128xf32, #tpu.memory_space<vmem>>, vector<1x1x128xf32>
    tpu.vector_store %arg8[%c0_19, %c0_20, %c0_21], %21 {strides = array<i32>} : memref<1x1x128xf32, #tpu.memory_space<vmem>>, vector<1x1x128xf32>,
    %23 = arith.mulf %16, %16 : vector<128x128xf32>
    %cst_22 = arith.constant dense<0.000000e+00> : vector<128xf32>
    %24 = vector.multi_reduction <add>, %23, %cst_22 [0] : vector<128x128xf32> to vector<128xf32>
    %25 = vector.shape_cast %24 : vector<128xf32> to vector<1x128xf32>
    %26 = vector.shape_cast %25 : vector<1x128xf32> to vector<1x1x128xf32>
    %c0_23 = arith.constant 0 : index
    %c0_24 = arith.constant 0 : index
    %c0_25 = arith.constant 0 : index
    %27 = vector.load %arg9[%c0_23, %c0_24, %c0_25] : memref<1x1x128xf32, #tpu.memory_space<vmem>>, vector<1x1x128xf32>
    tpu.vector_store %arg9[%c0_23, %c0_24, %c0_25], %26 {strides = array<i32>} : memref<1x1x128xf32, #tpu.memory_space<vmem>>, vector<1x1x128xf32>,
    return
  }
  func.func @transform_0(%arg0: i32) -> (i32, i32) {
    %c0_i32 = arith.constant 0 : i32
    %c0_i32_0 = arith.constant 0 : i32
    return %arg0, %c0_i32 : i32, i32
  }
  func.func @transform_1(%arg0: i32) -> (i32, i32) {
    %c0_i32 = arith.constant 0 : i32
    %c0_i32_0 = arith.constant 0 : i32
    %c0_i32_1 = arith.constant 0 : i32
    return %c0_i32, %c0_i32_0 : i32, i32
  }
  func.func @transform_2(%arg0: i32) -> (i32, i32) {
    %c0_i32 = arith.constant 0 : i32
    %c0_i32_0 = arith.constant 0 : i32
    %c0_i32_1 = arith.constant 0 : i32
    return %c0_i32, %c0_i32_0 : i32, i32
  }
  func.func @transform_3(%arg0: i32) -> (i32, i32) {
    %c0_i32 = arith.constant 0 : i32
    %c0_i32_0 = arith.constant 0 : i32
    return %arg0, %c0_i32 : i32, i32
  }
  func.func @transform_4(%arg0: i32) -> (i32, i32) {
    %c0_i32 = arith.constant 0 : i32
    %c0_i32_0 = arith.constant 0 : i32
    return %arg0, %c0_i32 : i32, i32
  }
  func.func @transform_5(%arg0: i32) -> (i32, i32, i32) {
    %c0_i32 = arith.constant 0 : i32
    %c0_i32_0 = arith.constant 0 : i32
    %c0_i32_1 = arith.constant 0 : i32
    return %arg0, %c0_i32, %c0_i32_0 : i32, i32, i32
  }
  func.func @transform_6(%arg0: i32) -> (i32, i32, i32) {
    %c0_i32 = arith.constant 0 : i32
    %c0_i32_0 = arith.constant 0 : i32
    %c0_i32_1 = arith.constant 0 : i32
    return %arg0, %c0_i32, %c0_i32_0 : i32, i32, i32
  }
  func.func @transform_7(%arg0: i32) -> (i32, i32, i32) {
    %c0_i32 = arith.constant 0 : i32
    %c0_i32_0 = arith.constant 0 : i32
    %c0_i32_1 = arith.constant 0 : i32
    return %arg0, %c0_i32, %c0_i32_0 : i32, i32, i32
  }
  func.func @transform_8(%arg0: i32) -> (i32, i32, i32) {
    %c0_i32 = arith.constant 0 : i32
    %c0_i32_0 = arith.constant 0 : i32
    %c0_i32_1 = arith.constant 0 : i32
    return %arg0, %c0_i32, %c0_i32_0 : i32, i32, i32
  }
}

module attributes {stable_mosaic.version = 11 : i64} {
  func.func @_bn_act_kernel(%arg0: i32, %arg1: memref<128x128xbf16, #tpu.memory_space<vmem>>, %arg2: memref<1x128xf32, #tpu.memory_space<vmem>>, %arg3: memref<1x128xf32, #tpu.memory_space<vmem>>, %arg4: memref<128x128xbf16, #tpu.memory_space<vmem>>) attributes {dimension_semantics = [#tpu.dimension_semantics<parallel>], iteration_bounds = array<i64: 1>, scalar_prefetch = 0 : i64, scratch_operands = 0 : i64, tpu.core_type = #tpu.core_type<tc>, window_params = [{transform_indices = @transform_0, window_bounds = array<i64: 128, 128>}, {pipeline_mode = #tpu.pipeline_mode<synchronous>, transform_indices = @transform_1, window_bounds = array<i64: 1, 128>}, {pipeline_mode = #tpu.pipeline_mode<synchronous>, transform_indices = @transform_2, window_bounds = array<i64: 1, 128>}, {transform_indices = @transform_3, window_bounds = array<i64: 128, 128>}]} {
    %c0 = arith.constant 0 : index
    %c0_0 = arith.constant 0 : index
    %0 = vector.load %arg1[%c0, %c0_0] : memref<128x128xbf16, #tpu.memory_space<vmem>>, vector<128x128xbf16>
    %1 = arith.extf %0 : vector<128x128xbf16> to vector<128x128xf32>
    %c0_1 = arith.constant 0 : index
    %c0_2 = arith.constant 0 : index
    %2 = vector.load %arg2[%c0_1, %c0_2] : memref<1x128xf32, #tpu.memory_space<vmem>>, vector<1x128xf32>
    %3 = vector.broadcast %2 : vector<1x128xf32> to vector<128x128xf32>
    %4 = arith.mulf %1, %3 : vector<128x128xf32>
    %c0_3 = arith.constant 0 : index
    %c0_4 = arith.constant 0 : index
    %5 = vector.load %arg3[%c0_3, %c0_4] : memref<1x128xf32, #tpu.memory_space<vmem>>, vector<1x128xf32>
    %6 = vector.broadcast %5 : vector<1x128xf32> to vector<128x128xf32>
    %7 = arith.addf %4, %6 : vector<128x128xf32>
    %cst = arith.constant 0.000000e+00 : f32
    %8 = vector.broadcast %cst : f32 to vector<128x128xf32>
    %9 = arith.maximumf %7, %8 : vector<128x128xf32>
    %10 = arith.truncf %9 : vector<128x128xf32> to vector<128x128xbf16>
    %c0_5 = arith.constant 0 : index
    %c0_6 = arith.constant 0 : index
    %11 = vector.load %arg4[%c0_5, %c0_6] : memref<128x128xbf16, #tpu.memory_space<vmem>>, vector<128x128xbf16>
    tpu.vector_store %arg4[%c0_5, %c0_6], %10 {strides = array<i32>} : memref<128x128xbf16, #tpu.memory_space<vmem>>, vector<128x128xbf16>,
    return
  }
  func.func @transform_0(%arg0: i32) -> (i32, i32) {
    %c0_i32 = arith.constant 0 : i32
    %c0_i32_0 = arith.constant 0 : i32
    return %arg0, %c0_i32 : i32, i32
  }
  func.func @transform_1(%arg0: i32) -> (i32, i32) {
    %c0_i32 = arith.constant 0 : i32
    %c0_i32_0 = arith.constant 0 : i32
    %c0_i32_1 = arith.constant 0 : i32
    return %c0_i32, %c0_i32_0 : i32, i32
  }
  func.func @transform_2(%arg0: i32) -> (i32, i32) {
    %c0_i32 = arith.constant 0 : i32
    %c0_i32_0 = arith.constant 0 : i32
    %c0_i32_1 = arith.constant 0 : i32
    return %c0_i32, %c0_i32_0 : i32, i32
  }
  func.func @transform_3(%arg0: i32) -> (i32, i32) {
    %c0_i32 = arith.constant 0 : i32
    %c0_i32_0 = arith.constant 0 : i32
    return %arg0, %c0_i32 : i32, i32
  }
}

module attributes {stable_mosaic.version = 11 : i64} {
  func.func @_matmul_stats_kernel(%arg0: i32, %arg1: memref<128x128xbf16, #tpu.memory_space<vmem>>, %arg2: memref<128x128xbf16, #tpu.memory_space<vmem>>, %arg3: memref<128x128xbf16, #tpu.memory_space<vmem>>, %arg4: memref<1x1x128xf32, #tpu.memory_space<vmem>>, %arg5: memref<1x1x128xf32, #tpu.memory_space<vmem>>) attributes {dimension_semantics = [#tpu.dimension_semantics<parallel>], iteration_bounds = array<i64: 1>, scalar_prefetch = 0 : i64, scratch_operands = 0 : i64, tpu.core_type = #tpu.core_type<tc>, window_params = [{transform_indices = @transform_0, window_bounds = array<i64: 128, 128>}, {pipeline_mode = #tpu.pipeline_mode<synchronous>, transform_indices = @transform_1, window_bounds = array<i64: 128, 128>}, {transform_indices = @transform_2, window_bounds = array<i64: 128, 128>}, {transform_indices = @transform_3, window_bounds = array<i64: 1, 1, 128>}, {transform_indices = @transform_4, window_bounds = array<i64: 1, 1, 128>}]} {
    %c0 = arith.constant 0 : index
    %c0_0 = arith.constant 0 : index
    %0 = vector.load %arg1[%c0, %c0_0] : memref<128x128xbf16, #tpu.memory_space<vmem>>, vector<128x128xbf16>
    %c0_1 = arith.constant 0 : index
    %c0_2 = arith.constant 0 : index
    %1 = vector.load %arg2[%c0_1, %c0_2] : memref<128x128xbf16, #tpu.memory_space<vmem>>, vector<128x128xbf16>
    %cst = arith.constant dense<0.000000e+00> : vector<128x128xf32>
    %2 = tpu.matmul %0, %1, %cst {dimension_numbers = #tpu.dot_dimension_numbers<[1], [0], [0], [1], [0, 0, 1, 1], [], []>} : vector<128x128xbf16>, vector<128x128xbf16>, vector<128x128xf32> -> vector<128x128xf32>
    %3 = arith.truncf %2 : vector<128x128xf32> to vector<128x128xbf16>
    %c0_3 = arith.constant 0 : index
    %c0_4 = arith.constant 0 : index
    %4 = vector.load %arg3[%c0_3, %c0_4] : memref<128x128xbf16, #tpu.memory_space<vmem>>, vector<128x128xbf16>
    tpu.vector_store %arg3[%c0_3, %c0_4], %3 {strides = array<i32>} : memref<128x128xbf16, #tpu.memory_space<vmem>>, vector<128x128xbf16>,
    %cst_5 = arith.constant dense<0.000000e+00> : vector<128xf32>
    %5 = vector.multi_reduction <add>, %2, %cst_5 [0] : vector<128x128xf32> to vector<128xf32>
    %6 = vector.shape_cast %5 : vector<128xf32> to vector<1x128xf32>
    %7 = vector.shape_cast %6 : vector<1x128xf32> to vector<1x1x128xf32>
    %c0_6 = arith.constant 0 : index
    %c0_7 = arith.constant 0 : index
    %c0_8 = arith.constant 0 : index
    %8 = vector.load %arg4[%c0_6, %c0_7, %c0_8] : memref<1x1x128xf32, #tpu.memory_space<vmem>>, vector<1x1x128xf32>
    tpu.vector_store %arg4[%c0_6, %c0_7, %c0_8], %7 {strides = array<i32>} : memref<1x1x128xf32, #tpu.memory_space<vmem>>, vector<1x1x128xf32>,
    %9 = arith.mulf %2, %2 : vector<128x128xf32>
    %cst_9 = arith.constant dense<0.000000e+00> : vector<128xf32>
    %10 = vector.multi_reduction <add>, %9, %cst_9 [0] : vector<128x128xf32> to vector<128xf32>
    %11 = vector.shape_cast %10 : vector<128xf32> to vector<1x128xf32>
    %12 = vector.shape_cast %11 : vector<1x128xf32> to vector<1x1x128xf32>
    %c0_10 = arith.constant 0 : index
    %c0_11 = arith.constant 0 : index
    %c0_12 = arith.constant 0 : index
    %13 = vector.load %arg5[%c0_10, %c0_11, %c0_12] : memref<1x1x128xf32, #tpu.memory_space<vmem>>, vector<1x1x128xf32>
    tpu.vector_store %arg5[%c0_10, %c0_11, %c0_12], %12 {strides = array<i32>} : memref<1x1x128xf32, #tpu.memory_space<vmem>>, vector<1x1x128xf32>,
    return
  }
  func.func @transform_0(%arg0: i32) -> (i32, i32) {
    %c0_i32 = arith.constant 0 : i32
    %c0_i32_0 = arith.constant 0 : i32
    return %arg0, %c0_i32 : i32, i32
  }
  func.func @transform_1(%arg0: i32) -> (i32, i32) {
    %c0_i32 = arith.constant 0 : i32
    %c0_i32_0 = arith.constant 0 : i32
    %c0_i32_1 = arith.constant 0 : i32
    return %c0_i32, %c0_i32_0 : i32, i32
  }
  func.func @transform_2(%arg0: i32) -> (i32, i32) {
    %c0_i32 = arith.constant 0 : i32
    %c0_i32_0 = arith.constant 0 : i32
    return %arg0, %c0_i32 : i32, i32
  }
  func.func @transform_3(%arg0: i32) -> (i32, i32, i32) {
    %c0_i32 = arith.constant 0 : i32
    %c0_i32_0 = arith.constant 0 : i32
    %c0_i32_1 = arith.constant 0 : i32
    return %arg0, %c0_i32, %c0_i32_0 : i32, i32, i32
  }
  func.func @transform_4(%arg0: i32) -> (i32, i32, i32) {
    %c0_i32 = arith.constant 0 : i32
    %c0_i32_0 = arith.constant 0 : i32
    %c0_i32_1 = arith.constant 0 : i32
    return %arg0, %c0_i32, %c0_i32_0 : i32, i32, i32
  }
}

module attributes {stable_mosaic.version = 11 : i64} {
  func.func @_bn_add_relu_kernel(%arg0: i32, %arg1: memref<128x128xbf16, #tpu.memory_space<vmem>>, %arg2: memref<128x128xbf16, #tpu.memory_space<vmem>>, %arg3: memref<1x128xf32, #tpu.memory_space<vmem>>, %arg4: memref<1x128xf32, #tpu.memory_space<vmem>>, %arg5: memref<1x128xf32, #tpu.memory_space<vmem>>, %arg6: memref<1x128xf32, #tpu.memory_space<vmem>>, %arg7: memref<128x128xf32, #tpu.memory_space<vmem>>) attributes {dimension_semantics = [#tpu.dimension_semantics<parallel>], iteration_bounds = array<i64: 1>, scalar_prefetch = 0 : i64, scratch_operands = 0 : i64, tpu.core_type = #tpu.core_type<tc>, window_params = [{transform_indices = @transform_0, window_bounds = array<i64: 128, 128>}, {transform_indices = @transform_1, window_bounds = array<i64: 128, 128>}, {pipeline_mode = #tpu.pipeline_mode<synchronous>, transform_indices = @transform_2, window_bounds = array<i64: 1, 128>}, {pipeline_mode = #tpu.pipeline_mode<synchronous>, transform_indices = @transform_3, window_bounds = array<i64: 1, 128>}, {pipeline_mode = #tpu.pipeline_mode<synchronous>, transform_indices = @transform_4, window_bounds = array<i64: 1, 128>}, {pipeline_mode = #tpu.pipeline_mode<synchronous>, transform_indices = @transform_5, window_bounds = array<i64: 1, 128>}, {transform_indices = @transform_6, window_bounds = array<i64: 128, 128>}]} {
    %c0 = arith.constant 0 : index
    %c0_0 = arith.constant 0 : index
    %0 = vector.load %arg1[%c0, %c0_0] : memref<128x128xbf16, #tpu.memory_space<vmem>>, vector<128x128xbf16>
    %1 = arith.extf %0 : vector<128x128xbf16> to vector<128x128xf32>
    %c0_1 = arith.constant 0 : index
    %c0_2 = arith.constant 0 : index
    %2 = vector.load %arg3[%c0_1, %c0_2] : memref<1x128xf32, #tpu.memory_space<vmem>>, vector<1x128xf32>
    %3 = vector.broadcast %2 : vector<1x128xf32> to vector<128x128xf32>
    %4 = arith.mulf %1, %3 : vector<128x128xf32>
    %c0_3 = arith.constant 0 : index
    %c0_4 = arith.constant 0 : index
    %5 = vector.load %arg4[%c0_3, %c0_4] : memref<1x128xf32, #tpu.memory_space<vmem>>, vector<1x128xf32>
    %6 = vector.broadcast %5 : vector<1x128xf32> to vector<128x128xf32>
    %7 = arith.addf %4, %6 : vector<128x128xf32>
    %c0_5 = arith.constant 0 : index
    %c0_6 = arith.constant 0 : index
    %8 = vector.load %arg2[%c0_5, %c0_6] : memref<128x128xbf16, #tpu.memory_space<vmem>>, vector<128x128xbf16>
    %9 = arith.extf %8 : vector<128x128xbf16> to vector<128x128xf32>
    %c0_7 = arith.constant 0 : index
    %c0_8 = arith.constant 0 : index
    %10 = vector.load %arg5[%c0_7, %c0_8] : memref<1x128xf32, #tpu.memory_space<vmem>>, vector<1x128xf32>
    %11 = vector.broadcast %10 : vector<1x128xf32> to vector<128x128xf32>
    %12 = arith.mulf %9, %11 : vector<128x128xf32>
    %c0_9 = arith.constant 0 : index
    %c0_10 = arith.constant 0 : index
    %13 = vector.load %arg6[%c0_9, %c0_10] : memref<1x128xf32, #tpu.memory_space<vmem>>, vector<1x128xf32>
    %14 = vector.broadcast %13 : vector<1x128xf32> to vector<128x128xf32>
    %15 = arith.addf %12, %14 : vector<128x128xf32>
    %16 = arith.addf %7, %15 : vector<128x128xf32>
    %cst = arith.constant 0.000000e+00 : f32
    %17 = vector.broadcast %cst : f32 to vector<128x128xf32>
    %18 = arith.maximumf %16, %17 : vector<128x128xf32>
    %c0_11 = arith.constant 0 : index
    %c0_12 = arith.constant 0 : index
    %19 = vector.load %arg7[%c0_11, %c0_12] : memref<128x128xf32, #tpu.memory_space<vmem>>, vector<128x128xf32>
    tpu.vector_store %arg7[%c0_11, %c0_12], %18 {strides = array<i32>} : memref<128x128xf32, #tpu.memory_space<vmem>>, vector<128x128xf32>,
    return
  }
  func.func @transform_0(%arg0: i32) -> (i32, i32) {
    %c0_i32 = arith.constant 0 : i32
    %c0_i32_0 = arith.constant 0 : i32
    return %arg0, %c0_i32 : i32, i32
  }
  func.func @transform_1(%arg0: i32) -> (i32, i32) {
    %c0_i32 = arith.constant 0 : i32
    %c0_i32_0 = arith.constant 0 : i32
    return %arg0, %c0_i32 : i32, i32
  }
  func.func @transform_2(%arg0: i32) -> (i32, i32) {
    %c0_i32 = arith.constant 0 : i32
    %c0_i32_0 = arith.constant 0 : i32
    %c0_i32_1 = arith.constant 0 : i32
    return %c0_i32, %c0_i32_0 : i32, i32
  }
  func.func @transform_3(%arg0: i32) -> (i32, i32) {
    %c0_i32 = arith.constant 0 : i32
    %c0_i32_0 = arith.constant 0 : i32
    %c0_i32_1 = arith.constant 0 : i32
    return %c0_i32, %c0_i32_0 : i32, i32
  }
  func.func @transform_4(%arg0: i32) -> (i32, i32) {
    %c0_i32 = arith.constant 0 : i32
    %c0_i32_0 = arith.constant 0 : i32
    %c0_i32_1 = arith.constant 0 : i32
    return %c0_i32, %c0_i32_0 : i32, i32
  }
  func.func @transform_5(%arg0: i32) -> (i32, i32) {
    %c0_i32 = arith.constant 0 : i32
    %c0_i32_0 = arith.constant 0 : i32
    %c0_i32_1 = arith.constant 0 : i32
    return %c0_i32, %c0_i32_0 : i32, i32
  }
  func.func @transform_6(%arg0: i32) -> (i32, i32) {
    %c0_i32 = arith.constant 0 : i32
    %c0_i32_0 = arith.constant 0 : i32
    return %arg0, %c0_i32 : i32, i32
  }
}

</mosaic_0001>

<llo_original>
// kernel: basic_block_forward.5
$region0: #{basic_block_forward.5}
  #allocation0 [shape = 'u32[]', space=smem, size = 0x4, offset = 0x4, fixed_abs, tag = 'smem constant byte address 0x4 - core index']
  #allocation1 [shape = 'u32[144,128]{1,0:T(1,128)}', space=vmem, size = 0x12000, scoped, tag = 'internal scratch']
  %s0 = inlined_call_operand.vmem [shape: bf16[128,128], index: 0, kind: input, shape index: {}]
  %s1 = inlined_call_operand.vmem [shape: f32[1,128], index: 1, kind: input, shape index: {}]
  %s2 = inlined_call_operand.vmem [shape: f32[1,128], index: 2, kind: input, shape index: {}]
  %s3 = inlined_call_operand.vmem [shape: bf16[128,128], index: 3, kind: output, shape index: {}]
  %s4 = sld [smem:[#allocation0]]
  $region22: #{basic_block_forward.5} parent=0
    _
  %s6 = ssub.s32 1, %s4
  %s7 = scalar_select 0, %s6, %s4
  // Predicated region
  $region2: #{basic_block_forward.5} parent=0 // pred_check
    _
  $region3: #{basic_block_forward.5} parent=0 // pred_check_branch
    %9 = sbr.rel (0) target = $region5
  $region4: #{basic_block_forward.5} parent=0 // pred_region
    _
  $region5: #{basic_block_forward.5} parent=0 // pred_fallthru
    _
  // Predicated region
  $region6: #{basic_block_forward.5} parent=0 // pred_check
    _
  $region7: #{basic_block_forward.5} parent=0 // pred_check_branch
    %11 = sbr.rel (0) target = $region9
  $region8: #{basic_block_forward.5} parent=0 // pred_region
    _
  $region9: #{basic_block_forward.5} parent=0 // pred_fallthru
    _
  // Predicated region
  $region10: #{basic_block_forward.5} parent=0 // pred_check
    _
  $region11: #{basic_block_forward.5} parent=0 // pred_check_branch
    %13 = sbr.rel (0) target = $region13
  $region12: #{basic_block_forward.5} parent=0 // pred_region
    _
  $region13: #{basic_block_forward.5} parent=0 // pred_fallthru
    _
  %v14 = vld [vmem:[%s0] sm:$0xf]
  %v15 = vld [vmem:[%s0 + $0x4] sm:$0xf]
  %v16 = vld [vmem:[%s0 + $0x8] sm:$0xf]
  %v17 = vld [vmem:[%s0 + $0xc] sm:$0xf]
  %v18 = vld [vmem:[%s0 + $0x10] sm:$0xf]
  %v19 = vld [vmem:[%s0 + $0x14] sm:$0xf]
  %v20 = vld [vmem:[%s0 + $0x18] sm:$0xf]
  %v21 = vld [vmem:[%s0 + $0x1c] sm:$0xf]
  %v22 = vld [vmem:[%s0 + $0x20] sm:$0xf]
  %v23 = vld [vmem:[%s0 + $0x24] sm:$0xf]
  %v24 = vld [vmem:[%s0 + $0x28] sm:$0xf]
  %v25 = vld [vmem:[%s0 + $0x2c] sm:$0xf]
  %v26 = vld [vmem:[%s0 + $0x30] sm:$0xf]
  %v27 = vld [vmem:[%s0 + $0x34] sm:$0xf]
  %v28 = vld [vmem:[%s0 + $0x38] sm:$0xf]
  %v29 = vld [vmem:[%s0 + $0x3c] sm:$0xf]
  %v30 = vunpack.c.l.bf16 %v14
  %v31 = vunpack.c.l.bf16 %v15
  %v32 = vunpack.c.l.bf16 %v16
  %v33 = vunpack.c.l.bf16 %v17
  %v34 = vunpack.c.l.bf16 %v18
  %v35 = vunpack.c.l.bf16 %v19
  %v36 = vunpack.c.l.bf16 %v20
  %v37 = vunpack.c.l.bf16 %v21
  %v38 = vunpack.c.l.bf16 %v22
  %v39 = vunpack.c.l.bf16 %v23
  %v40 = vunpack.c.l.bf16 %v24
  %v41 = vunpack.c.l.bf16 %v25
  %v42 = vunpack.c.l.bf16 %v26
  %v43 = vunpack.c.l.bf16 %v27
  %v44 = vunpack.c.l.bf16 %v28
  %v45 = vunpack.c.l.bf16 %v29
  %v46 = vld [vmem:[%s1] sm:$0x1]
  %v48 = vlaneseq
  %v49 = vshrl.u32 %v48, 7
  %v50 = vsub.s32 0, %v49
  %v51 = vrot.slane %v46, %v50
  %v53 = vmul.f32 %v30, %v51
  %v54 = vmul.f32 %v31, %v51
  %v55 = vmul.f32 %v32, %v51
  %v56 = vmul.f32 %v33, %v51
  %v57 = vmul.f32 %v34, %v51
  %v58 = vmul.f32 %v35, %v51
  %v59 = vmul.f32 %v36, %v51
  %v60 = vmul.f32 %v37, %v51
  %v61 = vmul.f32 %v38, %v51
  %v62 = vmul.f32 %v39, %v51
  %v63 = vmul.f32 %v40, %v51
  %v64 = vmul.f32 %v41, %v51
  %v65 = vmul.f32 %v42, %v51
  %v66 = vmul.f32 %v43, %v51
  %v67 = vmul.f32 %v44, %v51
  %v68 = vmul.f32 %v45, %v51
  %v69 = vld [vmem:[%s2] sm:$0x1]
  %v71 = vlaneseq
  %v72 = vshrl.u32 %v71, 7
  %v73 = vsub.s32 0, %v72
  %v74 = vrot.slane %v69, %v73
  %v76 = vadd.f32 %v53, %v74
  %v77 = vadd.f32 %v54, %v74
  %v78 = vadd.f32 %v55, %v74
  %v79 = vadd.f32 %v56, %v74
  %v80 = vadd.f32 %v57, %v74
  %v81 = vadd.f32 %v58, %v74
  %v82 = vadd.f32 %v59, %v74
  %v83 = vadd.f32 %v60, %v74
  %v84 = vadd.f32 %v61, %v74
  %v85 = vadd.f32 %v62, %v74
  %v86 = vadd.f32 %v63, %v74
  %v87 = vadd.f32 %v64, %v74
  %v88 = vadd.f32 %v65, %v74
  %v89 = vadd.f32 %v66, %v74
  %v90 = vadd.f32 %v67, %v74
  %v91 = vadd.f32 %v68, %v74
  %v92 = vmax.f32 %v76, 0.0
  %v93 = vmax.f32 %v77, 0.0
  %v94 = vmax.f32 %v78, 0.0
  %v95 = vmax.f32 %v79, 0.0
  %v96 = vmax.f32 %v80, 0.0
  %v97 = vmax.f32 %v81, 0.0
  %v98 = vmax.f32 %v82, 0.0
  %v99 = vmax.f32 %v83, 0.0
  %v100 = vmax.f32 %v84, 0.0
  %v101 = vmax.f32 %v85, 0.0
  %v102 = vmax.f32 %v86, 0.0
  %v103 = vmax.f32 %v87, 0.0
  %v104 = vmax.f32 %v88, 0.0
  %v105 = vmax.f32 %v89, 0.0
  %v106 = vmax.f32 %v90, 0.0
  %v107 = vmax.f32 %v91, 0.0
  %v108 = vpack.c.bf16 %v93, %v92
  %v109 = vpack.c.bf16 %v95, %v94
  %v110 = vpack.c.bf16 %v97, %v96
  %v111 = vpack.c.bf16 %v99, %v98
  %v112 = vpack.c.bf16 %v101, %v100
  %v113 = vpack.c.bf16 %v103, %v102
  %v114 = vpack.c.bf16 %v105, %v104
  %v115 = vpack.c.bf16 %v107, %v106
  %v124 = vunpack.c.l.b16 %v108
  %v125 = vunpack.c.h.b16 %v108
  %v126 = vunpack.c.l.b16 %v109
  %v127 = vunpack.c.h.b16 %v109
  %v128 = vunpack.c.l.b16 %v110
  %v129 = vunpack.c.h.b16 %v110
  %v130 = vunpack.c.l.b16 %v111
  %v131 = vunpack.c.h.b16 %v111
  %v132 = vunpack.c.l.b16 %v112
  %v133 = vunpack.c.h.b16 %v112
  %v134 = vunpack.c.l.b16 %v113
  %v135 = vunpack.c.h.b16 %v113
  %v136 = vunpack.c.l.b16 %v114
  %v137 = vunpack.c.h.b16 %v114
  %v138 = vunpack.c.l.b16 %v115
  %v139 = vunpack.c.h.b16 %v115
  %v140 = vpack.c.b16 %v124, %v124
  %v141 = vpack.c.b16 %v125, %v125
  %v142 = vpack.c.b16 %v126, %v126
  %v143 = vpack.c.b16 %v127, %v127
  %v144 = vpack.c.b16 %v128, %v128
  %v145 = vpack.c.b16 %v129, %v129
  %v146 = vpack.c.b16 %v130, %v130
  %v147 = vpack.c.b16 %v131, %v131
  %v148 = vpack.c.b16 %v132, %v132
  %v149 = vpack.c.b16 %v133, %v133
  %v150 = vpack.c.b16 %v134, %v134
  %v151 = vpack.c.b16 %v135, %v135
  %v152 = vpack.c.b16 %v136, %v136
  %v153 = vpack.c.b16 %v137, %v137
  %v154 = vpack.c.b16 %v138, %v138
  %v155 = vpack.c.b16 %v139, %v139
  %172 = vst [vmem:[%s3] sm:$0xf] %v140
  %173 = vst [vmem:[%s3 + $0x4] sm:$0xf] %v141
  %174 = vst [vmem:[%s3 + $0x8] sm:$0xf] %v142
  %175 = vst [vmem:[%s3 + $0xc] sm:$0xf] %v143
  %176 = vst [vmem:[%s3 + $0x10] sm:$0xf] %v144
  %177 = vst [vmem:[%s3 + $0x14] sm:$0xf] %v145
  %178 = vst [vmem:[%s3 + $0x18] sm:$0xf] %v146
  %179 = vst [vmem:[%s3 + $0x1c] sm:$0xf] %v147
  %180 = vst [vmem:[%s3 + $0x20] sm:$0xf] %v148
  %181 = vst [vmem:[%s3 + $0x24] sm:$0xf] %v149
  %182 = vst [vmem:[%s3 + $0x28] sm:$0xf] %v150
  %183 = vst [vmem:[%s3 + $0x2c] sm:$0xf] %v151
  %184 = vst [vmem:[%s3 + $0x30] sm:$0xf] %v152
  %185 = vst [vmem:[%s3 + $0x34] sm:$0xf] %v153
  %186 = vst [vmem:[%s3 + $0x38] sm:$0xf] %v154
  %187 = vst [vmem:[%s3 + $0x3c] sm:$0xf] %v155
  // Predicated region
  $region14: #{basic_block_forward.5} parent=0 // pred_check
    _
  $region15: #{basic_block_forward.5} parent=0 // pred_check_branch
    %189 = sbr.rel (0) target = $region17
  $region16: #{basic_block_forward.5} parent=0 // pred_region
    _
  $region17: #{basic_block_forward.5} parent=0 // pred_fallthru
    _
  // Predicated region
  $region18: #{basic_block_forward.5} parent=0 // pred_check
    _
  $region19: #{basic_block_forward.5} parent=0 // pred_check_branch
    %191 = sbr.rel (0) target = $region21
  $region20: #{basic_block_forward.5} parent=0 // pred_region
    _
  $region21: #{basic_block_forward.5} parent=0 // pred_fallthru
    _

// kernel: basic_block_forward.4
$region0: #{basic_block_forward.4}
  #allocation0 [shape = 'u32[]', space=smem, size = 0x4, offset = 0x4, fixed_abs, tag = 'smem constant byte address 0x4 - core index']
  #allocation1 [shape = 'u32[144,128]{1,0:T(1,128)}', space=vmem, size = 0x12000, scoped, tag = 'internal scratch']
  %s0 = inlined_call_operand.vmem [shape: bf16[128,128], index: 0, kind: input, shape index: {}]
  %s1 = inlined_call_operand.vmem [shape: bf16[128,128], index: 1, kind: input, shape index: {}]
  %s2 = inlined_call_operand.vmem [shape: bf16[8,128], index: 2, kind: input, shape index: {}]
  %s3 = inlined_call_operand.vmem [shape: bf16[128,128], index: 3, kind: output, shape index: {0}]
  %s4 = inlined_call_operand.vmem [shape: bf16[128,128], index: 4, kind: output, shape index: {1}]
  %s5 = inlined_call_operand.vmem [shape: f32[1,1,128], index: 5, kind: output, shape index: {2}]
  %s6 = inlined_call_operand.vmem [shape: f32[1,1,128], index: 6, kind: output, shape index: {3}]
  %s7 = inlined_call_operand.vmem [shape: f32[1,1,128], index: 7, kind: output, shape index: {4}]
  %s8 = inlined_call_operand.vmem [shape: f32[1,1,128], index: 8, kind: output, shape index: {5}]
  %9 = xla_tuple %s3, %s4, %s5, %s6, %s7, %s8
  %s10 = sld [smem:[#allocation0]]
  $region62: #{basic_block_forward.4} parent=0
    _
  %s12 = ssub.s32 1, %s10
  %s13 = scalar_select 0, %s12, %s10
  // Predicated region
  $region2: #{basic_block_forward.4} parent=0 // pred_check
    _
  $region3: #{basic_block_forward.4} parent=0 // pred_check_branch
    %15 = sbr.rel (0) target = $region5
  $region4: #{basic_block_forward.4} parent=0 // pred_region
    _
  $region5: #{basic_block_forward.4} parent=0 // pred_fallthru
    _
  // Predicated region
  $region6: #{basic_block_forward.4} parent=0 // pred_check
    _
  $region7: #{basic_block_forward.4} parent=0 // pred_check_branch
    %17 = sbr.rel (0) target = $region9
  $region8: #{basic_block_forward.4} parent=0 // pred_region
    _
  $region9: #{basic_block_forward.4} parent=0 // pred_fallthru
    _
  // Predicated region
  $region10: #{basic_block_forward.4} parent=0 // pred_check
    _
  $region11: #{basic_block_forward.4} parent=0 // pred_check_branch
    %19 = sbr.rel (0) target = $region13
  $region12: #{basic_block_forward.4} parent=0 // pred_region
    _
  $region13: #{basic_block_forward.4} parent=0 // pred_fallthru
    _
  %v21 = vld [vmem:[%s0] sm:$0xf]
  %v22 = vld [vmem:[%s0 + $0x4] sm:$0xf]
  %v23 = vld [vmem:[%s0 + $0x8] sm:$0xf]
  %v24 = vld [vmem:[%s0 + $0xc] sm:$0xf]
  %v25 = vld [vmem:[%s0 + $0x10] sm:$0xf]
  %v26 = vld [vmem:[%s0 + $0x14] sm:$0xf]
  %v27 = vld [vmem:[%s0 + $0x18] sm:$0xf]
  %v28 = vld [vmem:[%s0 + $0x1c] sm:$0xf]
  %v29 = vld [vmem:[%s0 + $0x20] sm:$0xf]
  %v30 = vld [vmem:[%s0 + $0x24] sm:$0xf]
  %v31 = vld [vmem:[%s0 + $0x28] sm:$0xf]
  %v32 = vld [vmem:[%s0 + $0x2c] sm:$0xf]
  %v33 = vld [vmem:[%s0 + $0x30] sm:$0xf]
  %v34 = vld [vmem:[%s0 + $0x34] sm:$0xf]
  %v35 = vld [vmem:[%s0 + $0x38] sm:$0xf]
  %v36 = vld [vmem:[%s0 + $0x3c] sm:$0xf]
  %v37 = vld [vmem:[%s1] sm:$0xf]
  %v38 = vld [vmem:[%s1 + $0x4] sm:$0xf]
  %v39 = vld [vmem:[%s1 + $0x8] sm:$0xf]
  %v40 = vld [vmem:[%s1 + $0xc] sm:$0xf]
  %v41 = vld [vmem:[%s1 + $0x10] sm:$0xf]
  %v42 = vld [vmem:[%s1 + $0x14] sm:$0xf]
  %v43 = vld [vmem:[%s1 + $0x18] sm:$0xf]
  %v44 = vld [vmem:[%s1 + $0x1c] sm:$0xf]
  %v45 = vld [vmem:[%s1 + $0x20] sm:$0xf]
  %v46 = vld [vmem:[%s1 + $0x24] sm:$0xf]
  %v47 = vld [vmem:[%s1 + $0x28] sm:$0xf]
  %v48 = vld [vmem:[%s1 + $0x2c] sm:$0xf]
  %v49 = vld [vmem:[%s1 + $0x30] sm:$0xf]
  %v50 = vld [vmem:[%s1 + $0x34] sm:$0xf]
  %v51 = vld [vmem:[%s1 + $0x38] sm:$0xf]
  %v52 = vld [vmem:[%s1 + $0x3c] sm:$0xf]
  %v69 = vunpack.c.l.b16 %v21
  %v70 = vunpack.c.l.b16 %v22
  %v71 = vunpack.c.l.b16 %v23
  %v72 = vunpack.c.l.b16 %v24
  %v73 = vunpack.c.l.b16 %v25
  %v74 = vunpack.c.l.b16 %v26
  %v75 = vunpack.c.l.b16 %v27
  %v76 = vunpack.c.l.b16 %v28
  %v77 = vunpack.c.l.b16 %v29
  %v78 = vunpack.c.l.b16 %v30
  %v79 = vunpack.c.l.b16 %v31
  %v80 = vunpack.c.l.b16 %v32
  %v81 = vunpack.c.l.b16 %v33
  %v82 = vunpack.c.l.b16 %v34
  %v83 = vunpack.c.l.b16 %v35
  %v84 = vunpack.c.l.b16 %v36
  %v85 = vpack.c.b16 %v70, %v69
  %v86 = vpack.c.b16 %v72, %v71
  %v87 = vpack.c.b16 %v74, %v73
  %v88 = vpack.c.b16 %v76, %v75
  %v89 = vpack.c.b16 %v78, %v77
  %v90 = vpack.c.b16 %v80, %v79
  %v91 = vpack.c.b16 %v82, %v81
  %v92 = vpack.c.b16 %v84, %v83
  %v117 = vunpack.c.l.b16 %v37
  %v118 = vunpack.c.l.b16 %v38
  %v119 = vunpack.c.l.b16 %v39
  %v120 = vunpack.c.l.b16 %v40
  %v121 = vunpack.c.l.b16 %v41
  %v122 = vunpack.c.l.b16 %v42
  %v123 = vunpack.c.l.b16 %v43
  %v124 = vunpack.c.l.b16 %v44
  %v125 = vunpack.c.l.b16 %v45
  %v126 = vunpack.c.l.b16 %v46
  %v127 = vunpack.c.l.b16 %v47
  %v128 = vunpack.c.l.b16 %v48
  %v129 = vunpack.c.l.b16 %v49
  %v130 = vunpack.c.l.b16 %v50
  %v131 = vunpack.c.l.b16 %v51
  %v132 = vunpack.c.l.b16 %v52
  %v133 = vpack.c.b16 %v118, %v117
  %v134 = vpack.c.b16 %v120, %v119
  %v135 = vpack.c.b16 %v122, %v121
  %v136 = vpack.c.b16 %v124, %v123
  %v137 = vpack.c.b16 %v126, %v125
  %v138 = vpack.c.b16 %v128, %v127
  %v139 = vpack.c.b16 %v130, %v129
  %v140 = vpack.c.b16 %v132, %v131
  %149 = vmatprep.subr.bf16.mxu0 0
  %150 = vmatpush1.bf16.msra.mxu0 %v133
  %151 = vmatprep.subr.bf16.mxu0 0
  %152 = vmatpush1.bf16.msra.mxu0 %v134
  %153 = vmatprep.subr.bf16.mxu0 0
  %154 = vmatpush1.bf16.msra.mxu0 %v135
  %155 = vmatprep.subr.bf16.mxu0 0
  %156 = vmatpush1.bf16.msra.mxu0 %v136
  %157 = vmatprep.subr.bf16.mxu0 0
  %158 = vmatpush1.bf16.msra.mxu0 %v137
  %159 = vmatprep.subr.bf16.mxu0 0
  %160 = vmatpush1.bf16.msra.mxu0 %v138
  %161 = vmatprep.subr.bf16.mxu0 0
  %162 = vmatpush1.bf16.msra.mxu0 %v139
  %163 = vmatprep.subr.bf16.mxu0 0
  %164 = vmatpush1.bf16.msra.mxu0 %v140
  %165 = vmatprep.subr.bf16.mxu0 0
  %166 = vmatpush1.bf16.msra.mxu0 0
  %167 = vmatprep.subr.bf16.mxu0 0
  %168 = vmatpush1.bf16.msra.mxu0 0
  %169 = vmatprep.subr.bf16.mxu0 0
  %170 = vmatpush1.bf16.msra.mxu0 0
  %171 = vmatprep.subr.bf16.mxu0 0
  %172 = vmatpush1.bf16.msra.mxu0 0
  %173 = vmatprep.subr.bf16.mxu0 0
  %174 = vmatpush1.bf16.msra.mxu0 0
  %175 = vmatprep.subr.bf16.mxu0 0
  %176 = vmatpush1.bf16.msra.mxu0 0
  %177 = vmatprep.subr.bf16.mxu0 0
  %178 = vmatpush1.bf16.msra.mxu0 0
  %179 = vmatprep.subr.bf16.mxu0 0
  %180 = vmatpush1.bf16.msra.mxu0 0
  %181 = vmatprep.mubr.bf16.mxu0 0
  %182 = vmatmul.mubr.bf16.gmra.mrb[0].mxu0 %v85
  %v183 = vpop.f32.mrb[0].mxu0
  %v184 = vadd.f32 0.0, %v183
  %v185 = vpop.f32.mrb[0].mxu0
  %v186 = vpop.f32.mrb[0].mxu0
  %v187 = vadd.f32 0.0, %v186
  %v188 = vpop.f32.mrb[0].mxu0
  %189 = vmatprep.mubr.bf16.mxu0 0
  %190 = vmatmul.mubr.bf16.gmra.mrb[0].mxu0 %v86
  %v191 = vpop.f32.mrb[0].mxu0
  %v192 = vadd.f32 0.0, %v191
  %v193 = vpop.f32.mrb[0].mxu0
  %v194 = vpop.f32.mrb[0].mxu0
  %v195 = vadd.f32 0.0, %v194
  %v196 = vpop.f32.mrb[0].mxu0
  %197 = vmatprep.mubr.bf16.mxu0 0
  %198 = vmatmul.mubr.bf16.gmra.mrb[0].mxu0 %v87
  %v199 = vpop.f32.mrb[0].mxu0
  %v200 = vadd.f32 0.0, %v199
  %v201 = vpop.f32.mrb[0].mxu0
  %v202 = vpop.f32.mrb[0].mxu0
  %v203 = vadd.f32 0.0, %v202
  %v204 = vpop.f32.mrb[0].mxu0
  %205 = vmatprep.mubr.bf16.mxu0 0
  %206 = vmatmul.mubr.bf16.gmra.mrb[0].mxu0 %v88
  %v207 = vpop.f32.mrb[0].mxu0
  %v208 = vadd.f32 0.0, %v207
  %v209 = vpop.f32.mrb[0].mxu0
  %v210 = vpop.f32.mrb[0].mxu0
  %v211 = vadd.f32 0.0, %v210
  %v212 = vpop.f32.mrb[0].mxu0
  %213 = vmatprep.mubr.bf16.mxu0 0
  %214 = vmatmul.mubr.bf16.gmra.mrb[0].mxu0 %v89
  %v215 = vpop.f32.mrb[0].mxu0
  %v216 = vadd.f32 0.0, %v215
  %v217 = vpop.f32.mrb[0].mxu0
  %v218 = vpop.f32.mrb[0].mxu0
  %v219 = vadd.f32 0.0, %v218
  %v220 = vpop.f32.mrb[0].mxu0
  %221 = vmatprep.mubr.bf16.mxu0 0
  %222 = vmatmul.mubr.bf16.gmra.mrb[0].mxu0 %v90
  %v223 = vpop.f32.mrb[0].mxu0
  %v224 = vadd.f32 0.0, %v223
  %v225 = vpop.f32.mrb[0].mxu0
  %v226 = vpop.f32.mrb[0].mxu0
  %v227 = vadd.f32 0.0, %v226
  %v228 = vpop.f32.mrb[0].mxu0
  %229 = vmatprep.mubr.bf16.mxu0 0
  %230 = vmatmul.mubr.bf16.gmra.mrb[0].mxu0 %v91
  %v231 = vpop.f32.mrb[0].mxu0
  %v232 = vadd.f32 0.0, %v231
  %v233 = vpop.f32.mrb[0].mxu0
  %v234 = vpop.f32.mrb[0].mxu0
  %v235 = vadd.f32 0.0, %v234
  %v236 = vpop.f32.mrb[0].mxu0
  %237 = vmatprep.mubr.bf16.mxu0 0
  %238 = vmatmul.mubr.bf16.gmra.mrb[0].mxu0 %v92
  %v239 = vpop.f32.mrb[0].mxu0
  %v240 = vadd.f32 0.0, %v239
  %v241 = vpop.f32.mrb[0].mxu0
  %v242 = vpop.f32.mrb[0].mxu0
  %v243 = vadd.f32 0.0, %v242
  %v244 = vpop.f32.mrb[0].mxu0
  %245 = vdwg.mxu0
  %v246 = vpack.c.bf16 %v187, %v184
  %v247 = vpack.c.bf16 %v195, %v192
  %v248 = vpack.c.bf16 %v203, %v200
  %v249 = vpack.c.bf16 %v211, %v208
  %v250 = vpack.c.bf16 %v219, %v216
  %v251 = vpack.c.bf16 %v227, %v224
  %v252 = vpack.c.bf16 %v235, %v232
  %v253 = vpack.c.bf16 %v243, %v240
  %v262 = vunpack.c.l.b16 %v246
  %v263 = vunpack.c.h.b16 %v246
  %v264 = vunpack.c.l.b16 %v247
  %v265 = vunpack.c.h.b16 %v247
  %v266 = vunpack.c.l.b16 %v248
  %v267 = vunpack.c.h.b16 %v248
  %v268 = vunpack.c.l.b16 %v249
  %v269 = vunpack.c.h.b16 %v249
  %v270 = vunpack.c.l.b16 %v250
  %v271 = vunpack.c.h.b16 %v250
  %v272 = vunpack.c.l.b16 %v251
  %v273 = vunpack.c.h.b16 %v251
  %v274 = vunpack.c.l.b16 %v252
  %v275 = vunpack.c.h.b16 %v252
  %v276 = vunpack.c.l.b16 %v253
  %v277 = vunpack.c.h.b16 %v253
  %v278 = vpack.c.b16 %v262, %v262
  %v279 = vpack.c.b16 %v263, %v263
  %v280 = vpack.c.b16 %v264, %v264
  %v281 = vpack.c.b16 %v265, %v265
  %v282 = vpack.c.b16 %v266, %v266
  %v283 = vpack.c.b16 %v267, %v267
  %v284 = vpack.c.b16 %v268, %v268
  %v285 = vpack.c.b16 %v269, %v269
  %v286 = vpack.c.b16 %v270, %v270
  %v287 = vpack.c.b16 %v271, %v271
  %v288 = vpack.c.b16 %v272, %v272
  %v289 = vpack.c.b16 %v273, %v273
  %v290 = vpack.c.b16 %v274, %v274
  %v291 = vpack.c.b16 %v275, %v275
  %v292 = vpack.c.b16 %v276, %v276
  %v293 = vpack.c.b16 %v277, %v277
  %310 = vst [vmem:[%s3] sm:$0xf] %v278
  %311 = vst [vmem:[%s3 + $0x4] sm:$0xf] %v279
  %312 = vst [vmem:[%s3 + $0x8] sm:$0xf] %v280
  %313 = vst [vmem:[%s3 + $0xc] sm:$0xf] %v281
  %314 = vst [vmem:[%s3 + $0x10] sm:$0xf] %v282
  %315 = vst [vmem:[%s3 + $0x14] sm:$0xf] %v283
  %316 = vst [vmem:[%s3 + $0x18] sm:$0xf] %v284
  %317 = vst [vmem:[%s3 + $0x1c] sm:$0xf] %v285
  %318 = vst [vmem:[%s3 + $0x20] sm:$0xf] %v286
  %319 = vst [vmem:[%s3 + $0x24] sm:$0xf] %v287
  %320 = vst [vmem:[%s3 + $0x28] sm:$0xf] %v288
  %321 = vst [vmem:[%s3 + $0x2c] sm:$0xf] %v289
  %322 = vst [vmem:[%s3 + $0x30] sm:$0xf] %v290
  %323 = vst [vmem:[%s3 + $0x34] sm:$0xf] %v291
  %324 = vst [vmem:[%s3 + $0x38] sm:$0xf] %v292
  %325 = vst [vmem:[%s3 + $0x3c] sm:$0xf] %v293
  %v326 = vadd.f32 %v184, %v187
  %v327 = vadd.f32 %v326, %v192
  %v328 = vadd.f32 %v327, %v195
  %v329 = vadd.f32 %v328, %v200
  %v330 = vadd.f32 %v329, %v203
  %v331 = vadd.f32 %v330, %v208
  %v332 = vadd.f32 %v331, %v211
  %v333 = vadd.f32 %v332, %v216
  %v334 = vadd.f32 %v333, %v219
  %v335 = vadd.f32 %v334, %v224
  %v336 = vadd.f32 %v335, %v227
  %v337 = vadd.f32 %v336, %v232
  %v338 = vadd.f32 %v337, %v235
  %v339 = vadd.f32 %v338, %v240
  %v340 = vadd.f32 %v339, %v243
  %v341 = vrot.slane %v340, 4
  %v342 = vadd.f32 %v340, %v341
  %v343 = vrot.slane %v342, 2
  %v344 = vadd.f32 %v342, %v343
  %v345 = vrot.slane %v344, 1
  %v346 = vadd.f32 %v344, %v345
  %347 = vst [vmem:[%s5] sm:$0x1] %v346
  %v348 = vmul.f32 %v184, %v184
  %v349 = vmul.f32 %v187, %v187
  %v350 = vmul.f32 %v192, %v192
  %v351 = vmul.f32 %v195, %v195
  %v352 = vmul.f32 %v200, %v200
  %v353 = vmul.f32 %v203, %v203
  %v354 = vmul.f32 %v208, %v208
  %v355 = vmul.f32 %v211, %v211
  %v356 = vmul.f32 %v216, %v216
  %v357 = vmul.f32 %v219, %v219
  %v358 = vmul.f32 %v224, %v224
  %v359 = vmul.f32 %v227, %v227
  %v360 = vmul.f32 %v232, %v232
  %v361 = vmul.f32 %v235, %v235
  %v362 = vmul.f32 %v240, %v240
  %v363 = vmul.f32 %v243, %v243
  %v364 = vadd.f32 %v348, %v349
  %v365 = vadd.f32 %v364, %v350
  %v366 = vadd.f32 %v365, %v351
  %v367 = vadd.f32 %v366, %v352
  %v368 = vadd.f32 %v367, %v353
  %v369 = vadd.f32 %v368, %v354
  %v370 = vadd.f32 %v369, %v355
  %v371 = vadd.f32 %v370, %v356
  %v372 = vadd.f32 %v371, %v357
  %v373 = vadd.f32 %v372, %v358
  %v374 = vadd.f32 %v373, %v359
  %v375 = vadd.f32 %v374, %v360
  %v376 = vadd.f32 %v375, %v361
  %v377 = vadd.f32 %v376, %v362
  %v378 = vadd.f32 %v377, %v363
  %v379 = vrot.slane %v378, 4
  %v380 = vadd.f32 %v378, %v379
  %v381 = vrot.slane %v380, 2
  %v382 = vadd.f32 %v380, %v381
  %v383 = vrot.slane %v382, 1
  %v384 = vadd.f32 %v382, %v383
  %385 = vst [vmem:[%s6] sm:$0x1] %v384
  %v386 = vld [vmem:[%s2] sm:$0xf]
  %387 = vrot.lane.b32.xlu0 %v85, 112
  %v388 = vpop.permute.xlu0 %387
  %389 = vrot.lane.b32.xlu0 %v86, 112
  %v390 = vpop.permute.xlu0 %389
  %391 = vrot.lane.b32.xlu0 %v87, 112
  %v392 = vpop.permute.xlu0 %391
  %393 = vrot.lane.b32.xlu0 %v88, 112
  %v394 = vpop.permute.xlu0 %393
  %395 = vrot.lane.b32.xlu0 %v89, 112
  %v396 = vpop.permute.xlu0 %395
  %397 = vrot.lane.b32.xlu0 %v90, 112
  %v398 = vpop.permute.xlu0 %397
  %399 = vrot.lane.b32.xlu0 %v91, 112
  %v400 = vpop.permute.xlu0 %399
  %401 = vrot.lane.b32.xlu0 %v92, 112
  %v402 = vpop.permute.xlu0 %401
  %vm403 = vcmask 64512
  %v405 = vsel %vm403, %v388, 0
  %v408 = vsel %vm403, %v390, 0
  %v411 = vsel %vm403, %v392, 0
  %v414 = vsel %vm403, %v394, 0
  %v417 = vsel %vm403, %v396, 0
  %v420 = vsel %vm403, %v398, 0
  %v423 = vsel %vm403, %v400, 0
  %v426 = vsel %vm403, %v402, 0
  %vm428 = vcmask 1043456
  %v430 = vsel %vm428, %v386, 0
  %432 = vmatprep.subr.bf16.mxu0 0
  %433 = vmatpush1.bf16.msra.mxu0 %v430
  %434 = vmatprep.subr.bf16.mxu0 0
  %435 = vmatpush1.bf16.msra.mxu0 0
  %436 = vmatprep.subr.bf16.mxu0 0
  %437 = vmatpush1.bf16.msra.mxu0 0
  %438 = vmatprep.subr.bf16.mxu0 0
  %439 = vmatpush1.bf16.msra.mxu0 0
  %440 = vmatprep.subr.bf16.mxu0 0
  %441 = vmatpush1.bf16.msra.mxu0 0
  %442 = vmatprep.subr.bf16.mxu0 0
  %443 = vmatpush1.bf16.msra.mxu0 0
  %444 = vmatprep.subr.bf16.mxu0 0
  %445 = vmatpush1.bf16.msra.mxu0 0
  %446 = vmatprep.subr.bf16.mxu0 0
  %447 = vmatpush1.bf16.msra.mxu0 0
  %448 = vmatprep.subr.bf16.mxu0 0
  %449 = vmatpush1.bf16.msra.mxu0 0
  %450 = vmatprep.subr.bf16.mxu0 0
  %451 = vmatpush1.bf16.msra.mxu0 0
  %452 = vmatprep.subr.bf16.mxu0 0
  %453 = vmatpush1.bf16.msra.mxu0 0
  %454 = vmatprep.subr.bf16.mxu0 0
  %455 = vmatpush1.bf16.msra.mxu0 0
  %456 = vmatprep.subr.bf16.mxu0 0
  %457 = vmatpush1.bf16.msra.mxu0 0
  %458 = vmatprep.subr.bf16.mxu0 0
  %459 = vmatpush1.bf16.msra.mxu0 0
  %460 = vmatprep.subr.bf16.mxu0 0
  %461 = vmatpush1.bf16.msra.mxu0 0
  %462 = vmatprep.subr.bf16.mxu0 0
  %463 = vmatpush1.bf16.msra.mxu0 0
  %464 = vmatprep.mubr.bf16.mxu0 0
  %465 = vmatmul.mubr.bf16.gmra.mrb[0].mxu0 %v405
  %v466 = vpop.f32.mrb[0].mxu0
  %v467 = vadd.f32 0.0, %v466
  %v468 = vpop.f32.mrb[0].mxu0
  %v469 = vpop.f32.mrb[0].mxu0
  %v470 = vadd.f32 0.0, %v469
  %v471 = vpop.f32.mrb[0].mxu0
  %472 = vmatprep.mubr.bf16.mxu0 0
  %473 = vmatmul.mubr.bf16.gmra.mrb[0].mxu0 %v408
  %v474 = vpop.f32.mrb[0].mxu0
  %v475 = vadd.f32 0.0, %v474
  %v476 = vpop.f32.mrb[0].mxu0
  %v477 = vpop.f32.mrb[0].mxu0
  %v478 = vadd.f32 0.0, %v477
  %v479 = vpop.f32.mrb[0].mxu0
  %480 = vmatprep.mubr.bf16.mxu0 0
  %481 = vmatmul.mubr.bf16.gmra.mrb[0].mxu0 %v411
  %v482 = vpop.f32.mrb[0].mxu0
  %v483 = vadd.f32 0.0, %v482
  %v484 = vpop.f32.mrb[0].mxu0
  %v485 = vpop.f32.mrb[0].mxu0
  %v486 = vadd.f32 0.0, %v485
  %v487 = vpop.f32.mrb[0].mxu0
  %488 = vmatprep.mubr.bf16.mxu0 0
  %489 = vmatmul.mubr.bf16.gmra.mrb[0].mxu0 %v414
  %v490 = vpop.f32.mrb[0].mxu0
  %v491 = vadd.f32 0.0, %v490
  %v492 = vpop.f32.mrb[0].mxu0
  %v493 = vpop.f32.mrb[0].mxu0
  %v494 = vadd.f32 0.0, %v493
  %v495 = vpop.f32.mrb[0].mxu0
  %496 = vmatprep.mubr.bf16.mxu0 0
  %497 = vmatmul.mubr.bf16.gmra.mrb[0].mxu0 %v417
  %v498 = vpop.f32.mrb[0].mxu0
  %v499 = vadd.f32 0.0, %v498
  %v500 = vpop.f32.mrb[0].mxu0
  %v501 = vpop.f32.mrb[0].mxu0
  %v502 = vadd.f32 0.0, %v501
  %v503 = vpop.f32.mrb[0].mxu0
  %504 = vmatprep.mubr.bf16.mxu0 0
  %505 = vmatmul.mubr.bf16.gmra.mrb[0].mxu0 %v420
  %v506 = vpop.f32.mrb[0].mxu0
  %v507 = vadd.f32 0.0, %v506
  %v508 = vpop.f32.mrb[0].mxu0
  %v509 = vpop.f32.mrb[0].mxu0
  %v510 = vadd.f32 0.0, %v509
  %v511 = vpop.f32.mrb[0].mxu0
  %512 = vmatprep.mubr.bf16.mxu0 0
  %513 = vmatmul.mubr.bf16.gmra.mrb[0].mxu0 %v423
  %v514 = vpop.f32.mrb[0].mxu0
  %v515 = vadd.f32 0.0, %v514
  %v516 = vpop.f32.mrb[0].mxu0
  %v517 = vpop.f32.mrb[0].mxu0
  %v518 = vadd.f32 0.0, %v517
  %v519 = vpop.f32.mrb[0].mxu0
  %520 = vmatprep.mubr.bf16.mxu0 0
  %521 = vmatmul.mubr.bf16.gmra.mrb[0].mxu0 %v426
  %v522 = vpop.f32.mrb[0].mxu0
  %v523 = vadd.f32 0.0, %v522
  %v524 = vpop.f32.mrb[0].mxu0
  %v525 = vpop.f32.mrb[0].mxu0
  %v526 = vadd.f32 0.0, %v525
  %v527 = vpop.f32.mrb[0].mxu0
  %528 = vdwg.mxu0
  %v529 = vpack.c.bf16 %v470, %v467
  %v530 = vpack.c.bf16 %v478, %v475
  %v531 = vpack.c.bf16 %v486, %v483
  %v532 = vpack.c.bf16 %v494, %v491
  %v533 = vpack.c.bf16 %v502, %v499
  %v534 = vpack.c.bf16 %v510, %v507
  %v535 = vpack.c.bf16 %v518, %v515
  %v536 = vpack.c.bf16 %v526, %v523
  %v545 = vunpack.c.l.b16 %v529
  %v546 = vunpack.c.h.b16 %v529
  %v547 = vunpack.c.l.b16 %v530
  %v548 = vunpack.c.h.b16 %v530
  %v549 = vunpack.c.l.b16 %v531
  %v550 = vunpack.c.h.b16 %v531
  %v551 = vunpack.c.l.b16 %v532
  %v552 = vunpack.c.h.b16 %v532
  %v553 = vunpack.c.l.b16 %v533
  %v554 = vunpack.c.h.b16 %v533
  %v555 = vunpack.c.l.b16 %v534
  %v556 = vunpack.c.h.b16 %v534
  %v557 = vunpack.c.l.b16 %v535
  %v558 = vunpack.c.h.b16 %v535
  %v559 = vunpack.c.l.b16 %v536
  %v560 = vunpack.c.h.b16 %v536
  %v561 = vpack.c.b16 %v545, %v545
  %v562 = vpack.c.b16 %v546, %v546
  %v563 = vpack.c.b16 %v547, %v547
  %v564 = vpack.c.b16 %v548, %v548
  %v565 = vpack.c.b16 %v549, %v549
  %v566 = vpack.c.b16 %v550, %v550
  %v567 = vpack.c.b16 %v551, %v551
  %v568 = vpack.c.b16 %v552, %v552
  %v569 = vpack.c.b16 %v553, %v553
  %v570 = vpack.c.b16 %v554, %v554
  %v571 = vpack.c.b16 %v555, %v555
  %v572 = vpack.c.b16 %v556, %v556
  %v573 = vpack.c.b16 %v557, %v557
  %v574 = vpack.c.b16 %v558, %v558
  %v575 = vpack.c.b16 %v559, %v559
  %v576 = vpack.c.b16 %v560, %v560
  %593 = vst [vmem:[%s4] sm:$0xf] %v561
  %594 = vst [vmem:[%s4 + $0x4] sm:$0xf] %v562
  %595 = vst [vmem:[%s4 + $0x8] sm:$0xf] %v563
  %596 = vst [vmem:[%s4 + $0xc] sm:$0xf] %v564
  %597 = vst [vmem:[%s4 + $0x10] sm:$0xf] %v565
  %598 = vst [vmem:[%s4 + $0x14] sm:$0xf] %v566
  %599 = vst [vmem:[%s4 + $0x18] sm:$0xf] %v567
  %600 = vst [vmem:[%s4 + $0x1c] sm:$0xf] %v568
  %601 = vst [vmem:[%s4 + $0x20] sm:$0xf] %v569
  %602 = vst [vmem:[%s4 + $0x24] sm:$0xf] %v570
  %603 = vst [vmem:[%s4 + $0x28] sm:$0xf] %v571
  %604 = vst [vmem:[%s4 + $0x2c] sm:$0xf] %v572
  %605 = vst [vmem:[%s4 + $0x30] sm:$0xf] %v573
  %606 = vst [vmem:[%s4 + $0x34] sm:$0xf] %v574
  %607 = vst [vmem:[%s4 + $0x38] sm:$0xf] %v575
  %608 = vst [vmem:[%s4 + $0x3c] sm:$0xf] %v576
  %v609 = vadd.f32 %v467, %v470
  %v610 = vadd.f32 %v609, %v475
  %v611 = vadd.f32 %v610, %v478
  %v612 = vadd.f32 %v611, %v483
  %v613 = vadd.f32 %v612, %v486
  %v614 = vadd.f32 %v613, %v491
  %v615 = vadd.f32 %v614, %v494
  %v616 = vadd.f32 %v615, %v499
  %v617 = vadd.f32 %v616, %v502
  %v618 = vadd.f32 %v617, %v507
  %v619 = vadd.f32 %v618, %v510
  %v620 = vadd.f32 %v619, %v515
  %v621 = vadd.f32 %v620, %v518
  %v622 = vadd.f32 %v621, %v523
  %v623 = vadd.f32 %v622, %v526
  %v624 = vrot.slane %v623, 4
  %v625 = vadd.f32 %v623, %v624
  %v626 = vrot.slane %v625, 2
  %v627 = vadd.f32 %v625, %v626
  %v628 = vrot.slane %v627, 1
  %v629 = vadd.f32 %v627, %v628
  %630 = vst [vmem:[%s7] sm:$0x1] %v629
  %v631 = vmul.f32 %v467, %v467
  %v632 = vmul.f32 %v470, %v470
  %v633 = vmul.f32 %v475, %v475
  %v634 = vmul.f32 %v478, %v478
  %v635 = vmul.f32 %v483, %v483
  %v636 = vmul.f32 %v486, %v486
  %v637 = vmul.f32 %v491, %v491
  %v638 = vmul.f32 %v494, %v494
  %v639 = vmul.f32 %v499, %v499
  %v640 = vmul.f32 %v502, %v502
  %v641 = vmul.f32 %v507, %v507
  %v642 = vmul.f32 %v510, %v510
  %v643 = vmul.f32 %v515, %v515
  %v644 = vmul.f32 %v518, %v518
  %v645 = vmul.f32 %v523, %v523
  %v646 = vmul.f32 %v526, %v526
  %v647 = vadd.f32 %v631, %v632
  %v648 = vadd.f32 %v647, %v633
  %v649 = vadd.f32 %v648, %v634
  %v650 = vadd.f32 %v649, %v635
  %v651 = vadd.f32 %v650, %v636
  %v652 = vadd.f32 %v651, %v637
  %v653 = vadd.f32 %v652, %v638
  %v654 = vadd.f32 %v653, %v639
  %v655 = vadd.f32 %v654, %v640
  %v656 = vadd.f32 %v655, %v641
  %v657 = vadd.f32 %v656, %v642
  %v658 = vadd.f32 %v657, %v643
  %v659 = vadd.f32 %v658, %v644
  %v660 = vadd.f32 %v659, %v645
  %v661 = vadd.f32 %v660, %v646
  %v662 = vrot.slane %v661, 4
  %v663 = vadd.f32 %v661, %v662
  %v664 = vrot.slane %v663, 2
  %v665 = vadd.f32 %v663, %v664
  %v666 = vrot.slane %v665, 1
  %v667 = vadd.f32 %v665, %v666
  %668 = vst [vmem:[%s8] sm:$0x1] %v667
  // Predicated region
  $region14: #{basic_block_forward.4} parent=0 // pred_check
    _
  $region15: #{basic_block_forward.4} parent=0 // pred_check_branch
    %670 = sbr.rel (0) target = $region17
  $region16: #{basic_block_forward.4} parent=0 // pred_region
    _
  $region17: #{basic_block_forward.4} parent=0 // pred_fallthru
    _
  // Predicated region
  $region18: #{basic_block_forward.4} parent=0 // pred_check
    _
  $region19: #{basic_block_forward.4} parent=0 // pred_check_branch
    %672 = sbr.rel (0) target = $region21
  $region20: #{basic_block_forward.4} parent=0 // pred_region
    _
  $region21: #{basic_block_forward.4} parent=0 // pred_fallthru
    _
  // Predicated region
  $region22: #{basic_block_forward.4} parent=0 // pred_check
    _
  $region23: #{basic_block_forward.4} parent=0 // pred_check_branch
    %674 = sbr.rel (0) target = $region25
  $region24: #{basic_block_forward.4} parent=0 // pred_region
    _
  $region25: #{basic_block_forward.4} parent=0 // pred_fallthru
    _
  // Predicated region
  $region26: #{basic_block_forward.4} parent=0 // pred_check
    _
  $region27: #{basic_block_forward.4} parent=0 // pred_check_branch
    %676 = sbr.rel (0) target = $region29
  $region28: #{basic_block_forward.4} parent=0 // pred_region
    _
  $region29: #{basic_block_forward.4} parent=0 // pred_fallthru
    _
  // Predicated region
  $region30: #{basic_block_forward.4} parent=0 // pred_check
    _
  $region31: #{basic_block_forward.4} parent=0 // pred_check_branch
    %678 = sbr.rel (0) target = $region33
  $region32: #{basic_block_forward.4} parent=0 // pred_region
    _
  $region33: #{basic_block_forward.4} parent=0 // pred_fallthru
    _
  // Predicated region
  $region34: #{basic_block_forward.4} parent=0 // pred_check
    _
  $region35: #{basic_block_forward.4} parent=0 // pred_check_branch
    %680 = sbr.rel (0) target = $region37
  $region36: #{basic_block_forward.4} parent=0 // pred_region
    _
  $region37: #{basic_block_forward.4} parent=0 // pred_fallthru
    _
  // Predicated region
  $region38: #{basic_block_forward.4} parent=0 // pred_check
    _
  $region39: #{basic_block_forward.4} parent=0 // pred_check_branch
    %682 = sbr.rel (0) target = $region41
  $region40: #{basic_block_forward.4} parent=0 // pred_region
    _
  $region41: #{basic_block_forward.4} parent=0 // pred_fallthru
    _
  // Predicated region
  $region42: #{basic_block_forward.4} parent=0 // pred_check
    _
  $region43: #{basic_block_forward.4} parent=0 // pred_check_branch
    %684 = sbr.rel (0) target = $region45
  $region44: #{basic_block_forward.4} parent=0 // pred_region
    _
  $region45: #{basic_block_forward.4} parent=0 // pred_fallthru
    _
  // Predicated region
  $region46: #{basic_block_forward.4} parent=0 // pred_check
    _
  $region47: #{basic_block_forward.4} parent=0 // pred_check_branch
    %686 = sbr.rel (0) target = $region49
  $region48: #{basic_block_forward.4} parent=0 // pred_region
    _
  $region49: #{basic_block_forward.4} parent=0 // pred_fallthru
    _
  // Predicated region
  $region50: #{basic_block_forward.4} parent=0 // pred_check
    _
  $region51: #{basic_block_forward.4} parent=0 // pred_check_branch
    %688 = sbr.rel (0) target = $region53
  $region52: #{basic_block_forward.4} parent=0 // pred_region
    _
  $region53: #{basic_block_forward.4} parent=0 // pred_fallthru
    _
  // Predicated region
  $region54: #{basic_block_forward.4} parent=0 // pred_check
    _
  $region55: #{basic_block_forward.4} parent=0 // pred_check_branch
    %690 = sbr.rel (0) target = $region57
  $region56: #{basic_block_forward.4} parent=0 // pred_region
    _
  $region57: #{basic_block_forward.4} parent=0 // pred_fallthru
    _
  // Predicated region
  $region58: #{basic_block_forward.4} parent=0 // pred_check
    _
  $region59: #{basic_block_forward.4} parent=0 // pred_check_branch
    %692 = sbr.rel (0) target = $region61
  $region60: #{basic_block_forward.4} parent=0 // pred_region
    _
  $region61: #{basic_block_forward.4} parent=0 // pred_fallthru
    _

// kernel: basic_block_forward.6
$region0: #{basic_block_forward.6}
  #allocation0 [shape = 'u32[]', space=smem, size = 0x4, offset = 0x4, fixed_abs, tag = 'smem constant byte address 0x4 - core index']
  #allocation1 [shape = 'u32[144,128]{1,0:T(1,128)}', space=vmem, size = 0x12000, scoped, tag = 'internal scratch']
  %s0 = inlined_call_operand.vmem [shape: bf16[128,128], index: 0, kind: input, shape index: {}]
  %s1 = inlined_call_operand.vmem [shape: bf16[128,128], index: 1, kind: input, shape index: {}]
  %s2 = inlined_call_operand.vmem [shape: bf16[128,128], index: 2, kind: output, shape index: {0}]
  %s3 = inlined_call_operand.vmem [shape: f32[1,1,128], index: 3, kind: output, shape index: {1}]
  %s4 = inlined_call_operand.vmem [shape: f32[1,1,128], index: 4, kind: output, shape index: {2}]
  %5 = xla_tuple %s2, %s3, %s4
  %s6 = sld [smem:[#allocation0]]
  $region34: #{basic_block_forward.6} parent=0
    _
  %s8 = ssub.s32 1, %s6
  %s9 = scalar_select 0, %s8, %s6
  // Predicated region
  $region2: #{basic_block_forward.6} parent=0 // pred_check
    _
  $region3: #{basic_block_forward.6} parent=0 // pred_check_branch
    %11 = sbr.rel (0) target = $region5
  $region4: #{basic_block_forward.6} parent=0 // pred_region
    _
  $region5: #{basic_block_forward.6} parent=0 // pred_fallthru
    _
  // Predicated region
  $region6: #{basic_block_forward.6} parent=0 // pred_check
    _
  $region7: #{basic_block_forward.6} parent=0 // pred_check_branch
    %13 = sbr.rel (0) target = $region9
  $region8: #{basic_block_forward.6} parent=0 // pred_region
    _
  $region9: #{basic_block_forward.6} parent=0 // pred_fallthru
    _
  %v15 = vld [vmem:[%s0] sm:$0xf]
  %v16 = vld [vmem:[%s0 + $0x4] sm:$0xf]
  %v17 = vld [vmem:[%s0 + $0x8] sm:$0xf]
  %v18 = vld [vmem:[%s0 + $0xc] sm:$0xf]
  %v19 = vld [vmem:[%s0 + $0x10] sm:$0xf]
  %v20 = vld [vmem:[%s0 + $0x14] sm:$0xf]
  %v21 = vld [vmem:[%s0 + $0x18] sm:$0xf]
  %v22 = vld [vmem:[%s0 + $0x1c] sm:$0xf]
  %v23 = vld [vmem:[%s0 + $0x20] sm:$0xf]
  %v24 = vld [vmem:[%s0 + $0x24] sm:$0xf]
  %v25 = vld [vmem:[%s0 + $0x28] sm:$0xf]
  %v26 = vld [vmem:[%s0 + $0x2c] sm:$0xf]
  %v27 = vld [vmem:[%s0 + $0x30] sm:$0xf]
  %v28 = vld [vmem:[%s0 + $0x34] sm:$0xf]
  %v29 = vld [vmem:[%s0 + $0x38] sm:$0xf]
  %v30 = vld [vmem:[%s0 + $0x3c] sm:$0xf]
  %v31 = vld [vmem:[%s1] sm:$0xf]
  %v32 = vld [vmem:[%s1 + $0x4] sm:$0xf]
  %v33 = vld [vmem:[%s1 + $0x8] sm:$0xf]
  %v34 = vld [vmem:[%s1 + $0xc] sm:$0xf]
  %v35 = vld [vmem:[%s1 + $0x10] sm:$0xf]
  %v36 = vld [vmem:[%s1 + $0x14] sm:$0xf]
  %v37 = vld [vmem:[%s1 + $0x18] sm:$0xf]
  %v38 = vld [vmem:[%s1 + $0x1c] sm:$0xf]
  %v39 = vld [vmem:[%s1 + $0x20] sm:$0xf]
  %v40 = vld [vmem:[%s1 + $0x24] sm:$0xf]
  %v41 = vld [vmem:[%s1 + $0x28] sm:$0xf]
  %v42 = vld [vmem:[%s1 + $0x2c] sm:$0xf]
  %v43 = vld [vmem:[%s1 + $0x30] sm:$0xf]
  %v44 = vld [vmem:[%s1 + $0x34] sm:$0xf]
  %v45 = vld [vmem:[%s1 + $0x38] sm:$0xf]
  %v46 = vld [vmem:[%s1 + $0x3c] sm:$0xf]
  %v63 = vunpack.c.l.b16 %v15
  %v64 = vunpack.c.l.b16 %v16
  %v65 = vunpack.c.l.b16 %v17
  %v66 = vunpack.c.l.b16 %v18
  %v67 = vunpack.c.l.b16 %v19
  %v68 = vunpack.c.l.b16 %v20
  %v69 = vunpack.c.l.b16 %v21
  %v70 = vunpack.c.l.b16 %v22
  %v71 = vunpack.c.l.b16 %v23
  %v72 = vunpack.c.l.b16 %v24
  %v73 = vunpack.c.l.b16 %v25
  %v74 = vunpack.c.l.b16 %v26
  %v75 = vunpack.c.l.b16 %v27
  %v76 = vunpack.c.l.b16 %v28
  %v77 = vunpack.c.l.b16 %v29
  %v78 = vunpack.c.l.b16 %v30
  %v79 = vpack.c.b16 %v64, %v63
  %v80 = vpack.c.b16 %v66, %v65
  %v81 = vpack.c.b16 %v68, %v67
  %v82 = vpack.c.b16 %v70, %v69
  %v83 = vpack.c.b16 %v72, %v71
  %v84 = vpack.c.b16 %v74, %v73
  %v85 = vpack.c.b16 %v76, %v75
  %v86 = vpack.c.b16 %v78, %v77
  %v111 = vunpack.c.l.b16 %v31
  %v112 = vunpack.c.l.b16 %v32
  %v113 = vunpack.c.l.b16 %v33
  %v114 = vunpack.c.l.b16 %v34
  %v115 = vunpack.c.l.b16 %v35
  %v116 = vunpack.c.l.b16 %v36
  %v117 = vunpack.c.l.b16 %v37
  %v118 = vunpack.c.l.b16 %v38
  %v119 = vunpack.c.l.b16 %v39
  %v120 = vunpack.c.l.b16 %v40
  %v121 = vunpack.c.l.b16 %v41
  %v122 = vunpack.c.l.b16 %v42
  %v123 = vunpack.c.l.b16 %v43
  %v124 = vunpack.c.l.b16 %v44
  %v125 = vunpack.c.l.b16 %v45
  %v126 = vunpack.c.l.b16 %v46
  %v127 = vpack.c.b16 %v112, %v111
  %v128 = vpack.c.b16 %v114, %v113
  %v129 = vpack.c.b16 %v116, %v115
  %v130 = vpack.c.b16 %v118, %v117
  %v131 = vpack.c.b16 %v120, %v119
  %v132 = vpack.c.b16 %v122, %v121
  %v133 = vpack.c.b16 %v124, %v123
  %v134 = vpack.c.b16 %v126, %v125
  %143 = vmatprep.subr.bf16.mxu0 0
  %144 = vmatpush1.bf16.msra.mxu0 %v127
  %145 = vmatprep.subr.bf16.mxu0 0
  %146 = vmatpush1.bf16.msra.mxu0 %v128
  %147 = vmatprep.subr.bf16.mxu0 0
  %148 = vmatpush1.bf16.msra.mxu0 %v129
  %149 = vmatprep.subr.bf16.mxu0 0
  %150 = vmatpush1.bf16.msra.mxu0 %v130
  %151 = vmatprep.subr.bf16.mxu0 0
  %152 = vmatpush1.bf16.msra.mxu0 %v131
  %153 = vmatprep.subr.bf16.mxu0 0
  %154 = vmatpush1.bf16.msra.mxu0 %v132
  %155 = vmatprep.subr.bf16.mxu0 0
  %156 = vmatpush1.bf16.msra.mxu0 %v133
  %157 = vmatprep.subr.bf16.mxu0 0
  %158 = vmatpush1.bf16.msra.mxu0 %v134
  %159 = vmatprep.subr.bf16.mxu0 0
  %160 = vmatpush1.bf16.msra.mxu0 0
  %161 = vmatprep.subr.bf16.mxu0 0
  %162 = vmatpush1.bf16.msra.mxu0 0
  %163 = vmatprep.subr.bf16.mxu0 0
  %164 = vmatpush1.bf16.msra.mxu0 0
  %165 = vmatprep.subr.bf16.mxu0 0
  %166 = vmatpush1.bf16.msra.mxu0 0
  %167 = vmatprep.subr.bf16.mxu0 0
  %168 = vmatpush1.bf16.msra.mxu0 0
  %169 = vmatprep.subr.bf16.mxu0 0
  %170 = vmatpush1.bf16.msra.mxu0 0
  %171 = vmatprep.subr.bf16.mxu0 0
  %172 = vmatpush1.bf16.msra.mxu0 0
  %173 = vmatprep.subr.bf16.mxu0 0
  %174 = vmatpush1.bf16.msra.mxu0 0
  %175 = vmatprep.mubr.bf16.mxu0 0
  %176 = vmatmul.mubr.bf16.gmra.mrb[0].mxu0 %v79
  %v177 = vpop.f32.mrb[0].mxu0
  %v178 = vadd.f32 0.0, %v177
  %v179 = vpop.f32.mrb[0].mxu0
  %v180 = vpop.f32.mrb[0].mxu0
  %v181 = vadd.f32 0.0, %v180
  %v182 = vpop.f32.mrb[0].mxu0
  %183 = vmatprep.mubr.bf16.mxu0 0
  %184 = vmatmul.mubr.bf16.gmra.mrb[0].mxu0 %v80
  %v185 = vpop.f32.mrb[0].mxu0
  %v186 = vadd.f32 0.0, %v185
  %v187 = vpop.f32.mrb[0].mxu0
  %v188 = vpop.f32.mrb[0].mxu0
  %v189 = vadd.f32 0.0, %v188
  %v190 = vpop.f32.mrb[0].mxu0
  %191 = vmatprep.mubr.bf16.mxu0 0
  %192 = vmatmul.mubr.bf16.gmra.mrb[0].mxu0 %v81
  %v193 = vpop.f32.mrb[0].mxu0
  %v194 = vadd.f32 0.0, %v193
  %v195 = vpop.f32.mrb[0].mxu0
  %v196 = vpop.f32.mrb[0].mxu0
  %v197 = vadd.f32 0.0, %v196
  %v198 = vpop.f32.mrb[0].mxu0
  %199 = vmatprep.mubr.bf16.mxu0 0
  %200 = vmatmul.mubr.bf16.gmra.mrb[0].mxu0 %v82
  %v201 = vpop.f32.mrb[0].mxu0
  %v202 = vadd.f32 0.0, %v201
  %v203 = vpop.f32.mrb[0].mxu0
  %v204 = vpop.f32.mrb[0].mxu0
  %v205 = vadd.f32 0.0, %v204
  %v206 = vpop.f32.mrb[0].mxu0
  %207 = vmatprep.mubr.bf16.mxu0 0
  %208 = vmatmul.mubr.bf16.gmra.mrb[0].mxu0 %v83
  %v209 = vpop.f32.mrb[0].mxu0
  %v210 = vadd.f32 0.0, %v209
  %v211 = vpop.f32.mrb[0].mxu0
  %v212 = vpop.f32.mrb[0].mxu0
  %v213 = vadd.f32 0.0, %v212
  %v214 = vpop.f32.mrb[0].mxu0
  %215 = vmatprep.mubr.bf16.mxu0 0
  %216 = vmatmul.mubr.bf16.gmra.mrb[0].mxu0 %v84
  %v217 = vpop.f32.mrb[0].mxu0
  %v218 = vadd.f32 0.0, %v217
  %v219 = vpop.f32.mrb[0].mxu0
  %v220 = vpop.f32.mrb[0].mxu0
  %v221 = vadd.f32 0.0, %v220
  %v222 = vpop.f32.mrb[0].mxu0
  %223 = vmatprep.mubr.bf16.mxu0 0
  %224 = vmatmul.mubr.bf16.gmra.mrb[0].mxu0 %v85
  %v225 = vpop.f32.mrb[0].mxu0
  %v226 = vadd.f32 0.0, %v225
  %v227 = vpop.f32.mrb[0].mxu0
  %v228 = vpop.f32.mrb[0].mxu0
  %v229 = vadd.f32 0.0, %v228
  %v230 = vpop.f32.mrb[0].mxu0
  %231 = vmatprep.mubr.bf16.mxu0 0
  %232 = vmatmul.mubr.bf16.gmra.mrb[0].mxu0 %v86
  %v233 = vpop.f32.mrb[0].mxu0
  %v234 = vadd.f32 0.0, %v233
  %v235 = vpop.f32.mrb[0].mxu0
  %v236 = vpop.f32.mrb[0].mxu0
  %v237 = vadd.f32 0.0, %v236
  %v238 = vpop.f32.mrb[0].mxu0
  %239 = vdwg.mxu0
  %v240 = vpack.c.bf16 %v181, %v178
  %v241 = vpack.c.bf16 %v189, %v186
  %v242 = vpack.c.bf16 %v197, %v194
  %v243 = vpack.c.bf16 %v205, %v202
  %v244 = vpack.c.bf16 %v213, %v210
  %v245 = vpack.c.bf16 %v221, %v218
  %v246 = vpack.c.bf16 %v229, %v226
  %v247 = vpack.c.bf16 %v237, %v234
  %v256 = vunpack.c.l.b16 %v240
  %v257 = vunpack.c.h.b16 %v240
  %v258 = vunpack.c.l.b16 %v241
  %v259 = vunpack.c.h.b16 %v241
  %v260 = vunpack.c.l.b16 %v242
  %v261 = vunpack.c.h.b16 %v242
  %v262 = vunpack.c.l.b16 %v243
  %v263 = vunpack.c.h.b16 %v243
  %v264 = vunpack.c.l.b16 %v244
  %v265 = vunpack.c.h.b16 %v244
  %v266 = vunpack.c.l.b16 %v245
  %v267 = vunpack.c.h.b16 %v245
  %v268 = vunpack.c.l.b16 %v246
  %v269 = vunpack.c.h.b16 %v246
  %v270 = vunpack.c.l.b16 %v247
  %v271 = vunpack.c.h.b16 %v247
  %v272 = vpack.c.b16 %v256, %v256
  %v273 = vpack.c.b16 %v257, %v257
  %v274 = vpack.c.b16 %v258, %v258
  %v275 = vpack.c.b16 %v259, %v259
  %v276 = vpack.c.b16 %v260, %v260
  %v277 = vpack.c.b16 %v261, %v261
  %v278 = vpack.c.b16 %v262, %v262
  %v279 = vpack.c.b16 %v263, %v263
  %v280 = vpack.c.b16 %v264, %v264
  %v281 = vpack.c.b16 %v265, %v265
  %v282 = vpack.c.b16 %v266, %v266
  %v283 = vpack.c.b16 %v267, %v267
  %v284 = vpack.c.b16 %v268, %v268
  %v285 = vpack.c.b16 %v269, %v269
  %v286 = vpack.c.b16 %v270, %v270
  %v287 = vpack.c.b16 %v271, %v271
  %304 = vst [vmem:[%s2] sm:$0xf] %v272
  %305 = vst [vmem:[%s2 + $0x4] sm:$0xf] %v273
  %306 = vst [vmem:[%s2 + $0x8] sm:$0xf] %v274
  %307 = vst [vmem:[%s2 + $0xc] sm:$0xf] %v275
  %308 = vst [vmem:[%s2 + $0x10] sm:$0xf] %v276
  %309 = vst [vmem:[%s2 + $0x14] sm:$0xf] %v277
  %310 = vst [vmem:[%s2 + $0x18] sm:$0xf] %v278
  %311 = vst [vmem:[%s2 + $0x1c] sm:$0xf] %v279
  %312 = vst [vmem:[%s2 + $0x20] sm:$0xf] %v280
  %313 = vst [vmem:[%s2 + $0x24] sm:$0xf] %v281
  %314 = vst [vmem:[%s2 + $0x28] sm:$0xf] %v282
  %315 = vst [vmem:[%s2 + $0x2c] sm:$0xf] %v283
  %316 = vst [vmem:[%s2 + $0x30] sm:$0xf] %v284
  %317 = vst [vmem:[%s2 + $0x34] sm:$0xf] %v285
  %318 = vst [vmem:[%s2 + $0x38] sm:$0xf] %v286
  %319 = vst [vmem:[%s2 + $0x3c] sm:$0xf] %v287
  %v320 = vadd.f32 %v178, %v181
  %v321 = vadd.f32 %v320, %v186
  %v322 = vadd.f32 %v321, %v189
  %v323 = vadd.f32 %v322, %v194
  %v324 = vadd.f32 %v323, %v197
  %v325 = vadd.f32 %v324, %v202
  %v326 = vadd.f32 %v325, %v205
  %v327 = vadd.f32 %v326, %v210
  %v328 = vadd.f32 %v327, %v213
  %v329 = vadd.f32 %v328, %v218
  %v330 = vadd.f32 %v329, %v221
  %v331 = vadd.f32 %v330, %v226
  %v332 = vadd.f32 %v331, %v229
  %v333 = vadd.f32 %v332, %v234
  %v334 = vadd.f32 %v333, %v237
  %v335 = vrot.slane %v334, 4
  %v336 = vadd.f32 %v334, %v335
  %v337 = vrot.slane %v336, 2
  %v338 = vadd.f32 %v336, %v337
  %v339 = vrot.slane %v338, 1
  %v340 = vadd.f32 %v338, %v339
  %341 = vst [vmem:[%s3] sm:$0x1] %v340
  %v342 = vmul.f32 %v178, %v178
  %v343 = vmul.f32 %v181, %v181
  %v344 = vmul.f32 %v186, %v186
  %v345 = vmul.f32 %v189, %v189
  %v346 = vmul.f32 %v194, %v194
  %v347 = vmul.f32 %v197, %v197
  %v348 = vmul.f32 %v202, %v202
  %v349 = vmul.f32 %v205, %v205
  %v350 = vmul.f32 %v210, %v210
  %v351 = vmul.f32 %v213, %v213
  %v352 = vmul.f32 %v218, %v218
  %v353 = vmul.f32 %v221, %v221
  %v354 = vmul.f32 %v226, %v226
  %v355 = vmul.f32 %v229, %v229
  %v356 = vmul.f32 %v234, %v234
  %v357 = vmul.f32 %v237, %v237
  %v358 = vadd.f32 %v342, %v343
  %v359 = vadd.f32 %v358, %v344
  %v360 = vadd.f32 %v359, %v345
  %v361 = vadd.f32 %v360, %v346
  %v362 = vadd.f32 %v361, %v347
  %v363 = vadd.f32 %v362, %v348
  %v364 = vadd.f32 %v363, %v349
  %v365 = vadd.f32 %v364, %v350
  %v366 = vadd.f32 %v365, %v351
  %v367 = vadd.f32 %v366, %v352
  %v368 = vadd.f32 %v367, %v353
  %v369 = vadd.f32 %v368, %v354
  %v370 = vadd.f32 %v369, %v355
  %v371 = vadd.f32 %v370, %v356
  %v372 = vadd.f32 %v371, %v357
  %v373 = vrot.slane %v372, 4
  %v374 = vadd.f32 %v372, %v373
  %v375 = vrot.slane %v374, 2
  %v376 = vadd.f32 %v374, %v375
  %v377 = vrot.slane %v376, 1
  %v378 = vadd.f32 %v376, %v377
  %379 = vst [vmem:[%s4] sm:$0x1] %v378
  // Predicated region
  $region10: #{basic_block_forward.6} parent=0 // pred_check
    _
  $region11: #{basic_block_forward.6} parent=0 // pred_check_branch
    %381 = sbr.rel (0) target = $region13
  $region12: #{basic_block_forward.6} parent=0 // pred_region
    _
  $region13: #{basic_block_forward.6} parent=0 // pred_fallthru
    _
  // Predicated region
  $region14: #{basic_block_forward.6} parent=0 // pred_check
    _
  $region15: #{basic_block_forward.6} parent=0 // pred_check_branch
    %383 = sbr.rel (0) target = $region17
  $region16: #{basic_block_forward.6} parent=0 // pred_region
    _
  $region17: #{basic_block_forward.6} parent=0 // pred_fallthru
    _
  // Predicated region
  $region18: #{basic_block_forward.6} parent=0 // pred_check
    _
  $region19: #{basic_block_forward.6} parent=0 // pred_check_branch
    %385 = sbr.rel (0) target = $region21
  $region20: #{basic_block_forward.6} parent=0 // pred_region
    _
  $region21: #{basic_block_forward.6} parent=0 // pred_fallthru
    _
  // Predicated region
  $region22: #{basic_block_forward.6} parent=0 // pred_check
    _
  $region23: #{basic_block_forward.6} parent=0 // pred_check_branch
    %387 = sbr.rel (0) target = $region25
  $region24: #{basic_block_forward.6} parent=0 // pred_region
    _
  $region25: #{basic_block_forward.6} parent=0 // pred_fallthru
    _
  // Predicated region
  $region26: #{basic_block_forward.6} parent=0 // pred_check
    _
  $region27: #{basic_block_forward.6} parent=0 // pred_check_branch
    %389 = sbr.rel (0) target = $region29
  $region28: #{basic_block_forward.6} parent=0 // pred_region
    _
  $region29: #{basic_block_forward.6} parent=0 // pred_fallthru
    _
  // Predicated region
  $region30: #{basic_block_forward.6} parent=0 // pred_check
    _
  $region31: #{basic_block_forward.6} parent=0 // pred_check_branch
    %391 = sbr.rel (0) target = $region33
  $region32: #{basic_block_forward.6} parent=0 // pred_region
    _
  $region33: #{basic_block_forward.6} parent=0 // pred_fallthru
    _

// kernel: basic_block_forward.7
$region0: #{basic_block_forward.7}
  #allocation0 [shape = 'u32[]', space=smem, size = 0x4, offset = 0x4, fixed_abs, tag = 'smem constant byte address 0x4 - core index']
  #allocation1 [shape = 'u32[144,128]{1,0:T(1,128)}', space=vmem, size = 0x12000, scoped, tag = 'internal scratch']
  %s0 = inlined_call_operand.vmem [shape: bf16[128,128], index: 0, kind: input, shape index: {}]
  %s1 = inlined_call_operand.vmem [shape: bf16[128,128], index: 1, kind: input, shape index: {}]
  %s2 = inlined_call_operand.vmem [shape: f32[1,128], index: 2, kind: input, shape index: {}]
  %s3 = inlined_call_operand.vmem [shape: f32[1,128], index: 3, kind: input, shape index: {}]
  %s4 = inlined_call_operand.vmem [shape: f32[1,128], index: 4, kind: input, shape index: {}]
  %s5 = inlined_call_operand.vmem [shape: f32[1,128], index: 5, kind: input, shape index: {}]
  %s6 = inlined_call_operand.vmem [shape: f32[128,128], index: 6, kind: output, shape index: {}]
  %s7 = sld [smem:[#allocation0]]
  $region34: #{basic_block_forward.7} parent=0
    _
  %s9 = ssub.s32 1, %s7
  %s10 = scalar_select 0, %s9, %s7
  // Predicated region
  $region2: #{basic_block_forward.7} parent=0 // pred_check
    _
  $region3: #{basic_block_forward.7} parent=0 // pred_check_branch
    %12 = sbr.rel (0) target = $region5
  $region4: #{basic_block_forward.7} parent=0 // pred_region
    _
  $region5: #{basic_block_forward.7} parent=0 // pred_fallthru
    _
  // Predicated region
  $region6: #{basic_block_forward.7} parent=0 // pred_check
    _
  $region7: #{basic_block_forward.7} parent=0 // pred_check_branch
    %14 = sbr.rel (0) target = $region9
  $region8: #{basic_block_forward.7} parent=0 // pred_region
    _
  $region9: #{basic_block_forward.7} parent=0 // pred_fallthru
    _
  // Predicated region
  $region10: #{basic_block_forward.7} parent=0 // pred_check
    _
  $region11: #{basic_block_forward.7} parent=0 // pred_check_branch
    %16 = sbr.rel (0) target = $region13
  $region12: #{basic_block_forward.7} parent=0 // pred_region
    _
  $region13: #{basic_block_forward.7} parent=0 // pred_fallthru
    _
  // Predicated region
  $region14: #{basic_block_forward.7} parent=0 // pred_check
    _
  $region15: #{basic_block_forward.7} parent=0 // pred_check_branch
    %18 = sbr.rel (0) target = $region17
  $region16: #{basic_block_forward.7} parent=0 // pred_region
    _
  $region17: #{basic_block_forward.7} parent=0 // pred_fallthru
    _
  // Predicated region
  $region18: #{basic_block_forward.7} parent=0 // pred_check
    _
  $region19: #{basic_block_forward.7} parent=0 // pred_check_branch
    %20 = sbr.rel (0) target = $region21
  $region20: #{basic_block_forward.7} parent=0 // pred_region
    _
  $region21: #{basic_block_forward.7} parent=0 // pred_fallthru
    _
  // Predicated region
  $region22: #{basic_block_forward.7} parent=0 // pred_check
    _
  $region23: #{basic_block_forward.7} parent=0 // pred_check_branch
    %22 = sbr.rel (0) target = $region25
  $region24: #{basic_block_forward.7} parent=0 // pred_region
    _
  $region25: #{basic_block_forward.7} parent=0 // pred_fallthru
    _
  %v23 = vld [vmem:[%s0] sm:$0xf]
  %v24 = vld [vmem:[%s0 + $0x4] sm:$0xf]
  %v25 = vld [vmem:[%s0 + $0x8] sm:$0xf]
  %v26 = vld [vmem:[%s0 + $0xc] sm:$0xf]
  %v27 = vld [vmem:[%s0 + $0x10] sm:$0xf]
  %v28 = vld [vmem:[%s0 + $0x14] sm:$0xf]
  %v29 = vld [vmem:[%s0 + $0x18] sm:$0xf]
  %v30 = vld [vmem:[%s0 + $0x1c] sm:$0xf]
  %v31 = vld [vmem:[%s0 + $0x20] sm:$0xf]
  %v32 = vld [vmem:[%s0 + $0x24] sm:$0xf]
  %v33 = vld [vmem:[%s0 + $0x28] sm:$0xf]
  %v34 = vld [vmem:[%s0 + $0x2c] sm:$0xf]
  %v35 = vld [vmem:[%s0 + $0x30] sm:$0xf]
  %v36 = vld [vmem:[%s0 + $0x34] sm:$0xf]
  %v37 = vld [vmem:[%s0 + $0x38] sm:$0xf]
  %v38 = vld [vmem:[%s0 + $0x3c] sm:$0xf]
  %v39 = vunpack.c.l.bf16 %v23
  %v40 = vunpack.c.l.bf16 %v24
  %v41 = vunpack.c.l.bf16 %v25
  %v42 = vunpack.c.l.bf16 %v26
  %v43 = vunpack.c.l.bf16 %v27
  %v44 = vunpack.c.l.bf16 %v28
  %v45 = vunpack.c.l.bf16 %v29
  %v46 = vunpack.c.l.bf16 %v30
  %v47 = vunpack.c.l.bf16 %v31
  %v48 = vunpack.c.l.bf16 %v32
  %v49 = vunpack.c.l.bf16 %v33
  %v50 = vunpack.c.l.bf16 %v34
  %v51 = vunpack.c.l.bf16 %v35
  %v52 = vunpack.c.l.bf16 %v36
  %v53 = vunpack.c.l.bf16 %v37
  %v54 = vunpack.c.l.bf16 %v38
  %v55 = vld [vmem:[%s2] sm:$0x1]
  %v57 = vlaneseq
  %v58 = vshrl.u32 %v57, 7
  %v59 = vsub.s32 0, %v58
  %v60 = vrot.slane %v55, %v59
  %v62 = vmul.f32 %v39, %v60
  %v63 = vmul.f32 %v40, %v60
  %v64 = vmul.f32 %v41, %v60
  %v65 = vmul.f32 %v42, %v60
  %v66 = vmul.f32 %v43, %v60
  %v67 = vmul.f32 %v44, %v60
  %v68 = vmul.f32 %v45, %v60
  %v69 = vmul.f32 %v46, %v60
  %v70 = vmul.f32 %v47, %v60
  %v71 = vmul.f32 %v48, %v60
  %v72 = vmul.f32 %v49, %v60
  %v73 = vmul.f32 %v50, %v60
  %v74 = vmul.f32 %v51, %v60
  %v75 = vmul.f32 %v52, %v60
  %v76 = vmul.f32 %v53, %v60
  %v77 = vmul.f32 %v54, %v60
  %v78 = vld [vmem:[%s3] sm:$0x1]
  %v80 = vlaneseq
  %v81 = vshrl.u32 %v80, 7
  %v82 = vsub.s32 0, %v81
  %v83 = vrot.slane %v78, %v82
  %v85 = vadd.f32 %v62, %v83
  %v86 = vadd.f32 %v63, %v83
  %v87 = vadd.f32 %v64, %v83
  %v88 = vadd.f32 %v65, %v83
  %v89 = vadd.f32 %v66, %v83
  %v90 = vadd.f32 %v67, %v83
  %v91 = vadd.f32 %v68, %v83
  %v92 = vadd.f32 %v69, %v83
  %v93 = vadd.f32 %v70, %v83
  %v94 = vadd.f32 %v71, %v83
  %v95 = vadd.f32 %v72, %v83
  %v96 = vadd.f32 %v73, %v83
  %v97 = vadd.f32 %v74, %v83
  %v98 = vadd.f32 %v75, %v83
  %v99 = vadd.f32 %v76, %v83
  %v100 = vadd.f32 %v77, %v83
  %v101 = vld [vmem:[%s1] sm:$0xf]
  %v102 = vld [vmem:[%s1 + $0x4] sm:$0xf]
  %v103 = vld [vmem:[%s1 + $0x8] sm:$0xf]
  %v104 = vld [vmem:[%s1 + $0xc] sm:$0xf]
  %v105 = vld [vmem:[%s1 + $0x10] sm:$0xf]
  %v106 = vld [vmem:[%s1 + $0x14] sm:$0xf]
  %v107 = vld [vmem:[%s1 + $0x18] sm:$0xf]
  %v108 = vld [vmem:[%s1 + $0x1c] sm:$0xf]
  %v109 = vld [vmem:[%s1 + $0x20] sm:$0xf]
  %v110 = vld [vmem:[%s1 + $0x24] sm:$0xf]
  %v111 = vld [vmem:[%s1 + $0x28] sm:$0xf]
  %v112 = vld [vmem:[%s1 + $0x2c] sm:$0xf]
  %v113 = vld [vmem:[%s1 + $0x30] sm:$0xf]
  %v114 = vld [vmem:[%s1 + $0x34] sm:$0xf]
  %v115 = vld [vmem:[%s1 + $0x38] sm:$0xf]
  %v116 = vld [vmem:[%s1 + $0x3c] sm:$0xf]
  %v117 = vunpack.c.l.bf16 %v101
  %v118 = vunpack.c.l.bf16 %v102
  %v119 = vunpack.c.l.bf16 %v103
  %v120 = vunpack.c.l.bf16 %v104
  %v121 = vunpack.c.l.bf16 %v105
  %v122 = vunpack.c.l.bf16 %v106
  %v123 = vunpack.c.l.bf16 %v107
  %v124 = vunpack.c.l.bf16 %v108
  %v125 = vunpack.c.l.bf16 %v109
  %v126 = vunpack.c.l.bf16 %v110
  %v127 = vunpack.c.l.bf16 %v111
  %v128 = vunpack.c.l.bf16 %v112
  %v129 = vunpack.c.l.bf16 %v113
  %v130 = vunpack.c.l.bf16 %v114
  %v131 = vunpack.c.l.bf16 %v115
  %v132 = vunpack.c.l.bf16 %v116
  %v133 = vld [vmem:[%s4] sm:$0x1]
  %v135 = vlaneseq
  %v136 = vshrl.u32 %v135, 7
  %v137 = vsub.s32 0, %v136
  %v138 = vrot.slane %v133, %v137
  %v140 = vmul.f32 %v117, %v138
  %v141 = vmul.f32 %v118, %v138
  %v142 = vmul.f32 %v119, %v138
  %v143 = vmul.f32 %v120, %v138
  %v144 = vmul.f32 %v121, %v138
  %v145 = vmul.f32 %v122, %v138
  %v146 = vmul.f32 %v123, %v138
  %v147 = vmul.f32 %v124, %v138
  %v148 = vmul.f32 %v125, %v138
  %v149 = vmul.f32 %v126, %v138
  %v150 = vmul.f32 %v127, %v138
  %v151 = vmul.f32 %v128, %v138
  %v152 = vmul.f32 %v129, %v138
  %v153 = vmul.f32 %v130, %v138
  %v154 = vmul.f32 %v131, %v138
  %v155 = vmul.f32 %v132, %v138
  %v156 = vld [vmem:[%s5] sm:$0x1]
  %v158 = vlaneseq
  %v159 = vshrl.u32 %v158, 7
  %v160 = vsub.s32 0, %v159
  %v161 = vrot.slane %v156, %v160
  %v163 = vadd.f32 %v140, %v161
  %v164 = vadd.f32 %v141, %v161
  %v165 = vadd.f32 %v142, %v161
  %v166 = vadd.f32 %v143, %v161
  %v167 = vadd.f32 %v144, %v161
  %v168 = vadd.f32 %v145, %v161
  %v169 = vadd.f32 %v146, %v161
  %v170 = vadd.f32 %v147, %v161
  %v171 = vadd.f32 %v148, %v161
  %v172 = vadd.f32 %v149, %v161
  %v173 = vadd.f32 %v150, %v161
  %v174 = vadd.f32 %v151, %v161
  %v175 = vadd.f32 %v152, %v161
  %v176 = vadd.f32 %v153, %v161
  %v177 = vadd.f32 %v154, %v161
  %v178 = vadd.f32 %v155, %v161
  %v179 = vadd.f32 %v85, %v163
  %v180 = vadd.f32 %v86, %v164
  %v181 = vadd.f32 %v87, %v165
  %v182 = vadd.f32 %v88, %v166
  %v183 = vadd.f32 %v89, %v167
  %v184 = vadd.f32 %v90, %v168
  %v185 = vadd.f32 %v91, %v169
  %v186 = vadd.f32 %v92, %v170
  %v187 = vadd.f32 %v93, %v171
  %v188 = vadd.f32 %v94, %v172
  %v189 = vadd.f32 %v95, %v173
  %v190 = vadd.f32 %v96, %v174
  %v191 = vadd.f32 %v97, %v175
  %v192 = vadd.f32 %v98, %v176
  %v193 = vadd.f32 %v99, %v177
  %v194 = vadd.f32 %v100, %v178
  %v195 = vmax.f32 %v179, 0.0
  %v196 = vmax.f32 %v180, 0.0
  %v197 = vmax.f32 %v181, 0.0
  %v198 = vmax.f32 %v182, 0.0
  %v199 = vmax.f32 %v183, 0.0
  %v200 = vmax.f32 %v184, 0.0
  %v201 = vmax.f32 %v185, 0.0
  %v202 = vmax.f32 %v186, 0.0
  %v203 = vmax.f32 %v187, 0.0
  %v204 = vmax.f32 %v188, 0.0
  %v205 = vmax.f32 %v189, 0.0
  %v206 = vmax.f32 %v190, 0.0
  %v207 = vmax.f32 %v191, 0.0
  %v208 = vmax.f32 %v192, 0.0
  %v209 = vmax.f32 %v193, 0.0
  %v210 = vmax.f32 %v194, 0.0
  %211 = vst [vmem:[%s6] sm:$0xff] %v195
  %212 = vst [vmem:[%s6 + $0x8] sm:$0xff] %v196
  %213 = vst [vmem:[%s6 + $0x10] sm:$0xff] %v197
  %214 = vst [vmem:[%s6 + $0x18] sm:$0xff] %v198
  %215 = vst [vmem:[%s6 + $0x20] sm:$0xff] %v199
  %216 = vst [vmem:[%s6 + $0x28] sm:$0xff] %v200
  %217 = vst [vmem:[%s6 + $0x30] sm:$0xff] %v201
  %218 = vst [vmem:[%s6 + $0x38] sm:$0xff] %v202
  %219 = vst [vmem:[%s6 + $0x40] sm:$0xff] %v203
  %220 = vst [vmem:[%s6 + $0x48] sm:$0xff] %v204
  %221 = vst [vmem:[%s6 + $0x50] sm:$0xff] %v205
  %222 = vst [vmem:[%s6 + $0x58] sm:$0xff] %v206
  %223 = vst [vmem:[%s6 + $0x60] sm:$0xff] %v207
  %224 = vst [vmem:[%s6 + $0x68] sm:$0xff] %v208
  %225 = vst [vmem:[%s6 + $0x70] sm:$0xff] %v209
  %226 = vst [vmem:[%s6 + $0x78] sm:$0xff] %v210
  // Predicated region
  $region26: #{basic_block_forward.7} parent=0 // pred_check
    _
  $region27: #{basic_block_forward.7} parent=0 // pred_check_branch
    %228 = sbr.rel (0) target = $region29
  $region28: #{basic_block_forward.7} parent=0 // pred_region
    _
  $region29: #{basic_block_forward.7} parent=0 // pred_fallthru
    _
  // Predicated region
  $region30: #{basic_block_forward.7} parent=0 // pred_check
    _
  $region31: #{basic_block_forward.7} parent=0 // pred_check_branch
    %230 = sbr.rel (0) target = $region33
  $region32: #{basic_block_forward.7} parent=0 // pred_region
    _
  $region33: #{basic_block_forward.7} parent=0 // pred_fallthru
    _

</llo_original>
